<compile_context>
chip_gen: v6e
topology: v6e:2x2x1
jax: 0.10.0
libtpu: 0.0.40
codegen_flags: <defaults>
</compile_context>

<pallas_src>
import functools
import math

import jax
import jax.numpy as jnp
from jax.experimental import pallas as pl
from jax.experimental.pallas import tpu as pltpu


def _gcn_layer_kernel(*refs, hw_first: bool, relu_out: bool, l2norm_out: bool,
                      h_resident: bool, tk: int):
    if hw_first:
        # Streamed operand is HW = H @ W (precomputed once per layer) -- W is
        # not needed inside the kernel at all.
        a_ref, h_ref, b_ref, out_ref, acc_ref = refs
        w_ref = None
    else:
        a_ref, h_ref, w_ref, b_ref, out_ref, acc_ref = refs

    k = pl.program_id(1)

    @pl.when(k == 0)
    def _init():
        acc_ref[...] = jnp.zeros_like(acc_ref)

    if h_resident:
        # Whole (padded) activation matrix lives in VMEM; slice the k-th slab.
        off = pl.multiple_of(k * tk, tk)
        h = h_ref[pl.ds(off, tk), :]
    else:
        h = h_ref[...]

    # bf16 x bf16 on the MXU, f32 accumulation (no per-step casts needed).
    acc_ref[...] += jnp.dot(a_ref[...], h, preferred_element_type=jnp.float32)

    @pl.when(k == pl.num_programs(1) - 1)
    def _finalize():
        if hw_first:
            out = acc_ref[...] + b_ref[...]
        else:
            # Apply W once per row-block: 1/(N/tk) of the layer's matmul work.
            out = jnp.dot(acc_ref[...], w_ref[...],
                          preferred_element_type=jnp.float32) + b_ref[...]
        if relu_out:
            # ReLU fused at the producer: the next layer reads post-ReLU bf16.
            out = jnp.maximum(out, 0.0)
        if l2norm_out:
            # Normalize(power=2): x / sqrt(sum(x^2)); eps avoids NaN on 0-rows.
            inv = jax.lax.rsqrt(jnp.sum(out * out, axis=1, keepdims=True) + 1e-12)
            out = out * inv
        out_ref[...] = out.astype(out_ref.dtype)


def gcn_layer(a_bf16, h_bf16, w, b, *, relu_out: bool, l2norm_out: bool,
              out_dtype, tm: int = 256, tk: int = 256, h_resident=None):
    """One fused GraphConv layer on a (padded) dense normalized adjacency."""
    n_pad = a_bf16.shape[0]
    f_in, f_out = w.shape
    hw_first = f_out < f_in

    if hw_first:
        # Hoist H@W out of the row loop: computed ONCE per layer (not once per
        # A row-block), then streamed in bf16.
        h_stream = jnp.dot(h_bf16.astype(jnp.float32), w,
                           preferred_element_type=jnp.float32).astype(jnp.bfloat16)
        stream_cols = f_out
    else:
        h_stream = h_bf16
        stream_cols = f_in

    if h_resident is None:
        # Keep the streamed operand fully VMEM-resident (one DMA per layer)
        # when small; 4 MiB threshold leaves ample headroom even on v7x.
        h_resident = n_pad * stream_cols * 2 <= 4 * 1024 * 1024

    acc_cols = f_out if hw_first else f_in
    kernel = functools.partial(_gcn_layer_kernel, hw_first=hw_first,
                               relu_out=relu_out, l2norm_out=l2norm_out,
                               h_resident=h_resident, tk=tk)

    in_specs = [pl.BlockSpec((tm, tk), lambda i, k: (i, k))]           # A (bf16)
    if h_resident:
        in_specs.append(pl.BlockSpec((n_pad, stream_cols), lambda i, k: (0, 0)))
    else:
        in_specs.append(pl.BlockSpec((tk, stream_cols), lambda i, k: (k, 0)))
    if not hw_first:
        in_specs.append(pl.BlockSpec((f_in, f_out), lambda i, k: (0, 0)))  # W
    in_specs.append(pl.BlockSpec((1, f_out), lambda i, k: (0, 0)))         # bias

    args = [a_bf16, h_stream]
    if not hw_first:
        args.append(w)
    args.append(b.reshape(1, f_out))

    return pl.pallas_call(
        kernel,
        out_shape=jax.ShapeDtypeStruct((n_pad, f_out), out_dtype),
        grid_spec=pltpu.PrefetchScalarGridSpec(
            num_scalar_prefetch=0,
            grid=(n_pad // tm, n_pad // tk),
            in_specs=in_specs,
            out_specs=pl.BlockSpec((tm, f_out), lambda i, k: (i, 0)),
            scratch_shapes=[pltpu.VMEM((tm, acc_cols), jnp.float32)],
        ),
        compiler_params=pltpu.CompilerParams(
            dimension_semantics=("parallel", "arbitrary")),
    )(*args)


def gnn_forward(a_norm, h, params, *, tm: int = 256, tk: int = 256,
                h_resident=None):
    """Matches GNN.forward: layer0 -> (ReLU -> layer_i)* -> L2-normalize."""
    n = h.shape[0]
    mult = math.lcm(tm, tk)
    n_pad = -(-n // mult) * mult
    pad = n_pad - n
    # Zero padding keeps real-row results exact (padded A rows/cols are 0).
    a = jnp.pad(a_norm, ((0, pad), (0, pad))).astype(jnp.bfloat16)
    h = jnp.pad(h, ((0, pad), (0, 0))).astype(jnp.bfloat16)

    num_layers = len(params)
    for i, (w, b) in enumerate(params):
        last = i == num_layers - 1
        h = gcn_layer(a, h, w, b,
                      relu_out=not last,          # ReLU fused at the producer
                      l2norm_out=last,
                      out_dtype=jnp.float32 if last else jnp.bfloat16,
                      tm=tm, tk=tk, h_resident=h_resident)
    return h[:n]


def gnn_reference(a_norm, h, params):
    """Pure-JAX f32 reference of the same forward pass (correctness check)."""
    for i, (w, b) in enumerate(params):
        if i > 0:
            h = jnp.maximum(h, 0.0)
        h = a_norm @ h @ w + b
    norm = jnp.sqrt(jnp.sum(h * h, axis=1, keepdims=True))
    return h / norm


def build_norm_adj(n):
    """Dense D^{-1/2} A D^{-1/2} for a symmetric ring graph on n nodes (glue)."""
    src = jnp.arange(n)
    dst = (src + 1) % n
    a = jnp.zeros((n, n), jnp.float32)
    a = a.at[dst, src].set(1.0)
    a = a.at[src, dst].set(1.0)
    deg = jnp.clip(a.sum(axis=1), 1.0)          # DGL clamps degrees to >= 1
    d_inv_sqrt = deg ** -0.5
    return d_inv_sqrt[:, None] * a * d_inv_sqrt[None, :]


def init_params(key, in_dim, hidden_dim, num_layers):
    """Deterministic Glorot-ish weights, zero biases (mirrors GraphConv shapes)."""
    params = []
    dims = [in_dim] + [hidden_dim] * num_layers
    keys = jax.random.split(key, num_layers)
    for i in range(num_layers):
        fan_in, fan_out = dims[i], dims[i + 1]
        scale = jnp.sqrt(2.0 / (fan_in + fan_out))
        w = scale * jax.random.normal(keys[i], (fan_in, fan_out), jnp.float32)
        b = jnp.zeros((fan_out,), jnp.float32)
        params.append((w, b))
    return params


if __name__ == "__main__":
    def run_case(n, in_dim, hidden, num_layers, tm, tk, h_resident, tol):
        key = jax.random.PRNGKey(0)
        k_feat, k_param = jax.random.split(key)
        h0 = jax.random.normal(k_feat, (n, in_dim), jnp.float32)  # g.ndata['h']
        a_norm = build_norm_adj(n)
        params = init_params(k_param, in_dim, hidden, num_layers)

        fwd = jax.jit(functools.partial(gnn_forward, tm=tm, tk=tk,
                                        h_resident=h_resident))
        out = jax.block_until_ready(fwd(a_norm, h0, params))
        assert out.shape == (n, hidden), out.shape

        # Rows must be unit L2 norm after Normalize(2).
        row_norm_err = float(jnp.max(jnp.abs(jnp.sum(out * out, axis=1) - 1.0)))
        assert row_norm_err < 1e-3, row_norm_err

        # Compare against pure-JAX f32 reference (kernel uses bf16 A and bf16
        # inter-layer activations).
        ref = gnn_reference(a_norm, h0, params)
        max_err = float(jnp.max(jnp.abs(out - ref)))
        assert max_err < tol, max_err

    # Case 1: (A@H)@W association, streamed operand VMEM-resident; N=200
    #         exercises padding to 256; lane-dense 128-wide output.
    run_case(n=200, in_dim=64, hidden=128, num_layers=2,
             tm=256, tk=256, h_resident=None, tol=3e-2)

    # Case 2: hoisted H@W path (F_out < F_in) with forced streaming row-slabs.
    run_case(n=200, in_dim=128, hidden=64, num_layers=2,
             tm=256, tk=256, h_resident=False, tol=3e-2)

    print("KERNEL_OK")
</pallas_src>

<mosaic_0001>
module attributes {stable_mosaic.version = 11 : i64} {
  func.func @_gcn_layer_kernel(%arg0: i32, %arg1: i32, %arg2: memref<256x256xbf16, #tpu.memory_space<vmem>>, %arg3: memref<256x64xbf16, #tpu.memory_space<vmem>>, %arg4: memref<64x128xf32, #tpu.memory_space<vmem>>, %arg5: memref<1x128xf32, #tpu.memory_space<vmem>>, %arg6: memref<256x128xbf16, #tpu.memory_space<vmem>>, %arg7: memref<256x64xf32, #tpu.memory_space<vmem>>) attributes {dimension_semantics = [#tpu.dimension_semantics<parallel>, #tpu.dimension_semantics<arbitrary>], iteration_bounds = array<i64: 1, 1>, scalar_prefetch = 0 : i64, scratch_operands = 1 : i64, tpu.core_type = #tpu.core_type<tc>, window_params = [{transform_indices = @transform_0, window_bounds = array<i64: 256, 256>}, {pipeline_mode = #tpu.pipeline_mode<synchronous>, transform_indices = @transform_1, window_bounds = array<i64: 256, 64>}, {pipeline_mode = #tpu.pipeline_mode<synchronous>, transform_indices = @transform_2, window_bounds = array<i64: 64, 128>}, {pipeline_mode = #tpu.pipeline_mode<synchronous>, transform_indices = @transform_3, window_bounds = array<i64: 1, 128>}, {transform_indices = @transform_4, window_bounds = array<i64: 256, 128>}]} {
    %c0_i32 = arith.constant 0 : i32
    %0 = arith.cmpi eq, %arg1, %c0_i32 : i32
    %1 = arith.extui %0 : i1 to i32
    %c0_i32_0 = arith.constant 0 : i32
    %2 = arith.cmpi ne, %1, %c0_i32_0 : i32
    scf.if %2 {
      %cst_9 = arith.constant 0.000000e+00 : f32
      %15 = vector.broadcast %cst_9 : f32 to vector<256x64xf32>
      %c0_10 = arith.constant 0 : index
      %c0_11 = arith.constant 0 : index
      %16 = vector.load %arg7[%c0_10, %c0_11] : memref<256x64xf32, #tpu.memory_space<vmem>>, vector<256x64xf32>
      tpu.vector_store %arg7[%c0_10, %c0_11], %15 {strides = array<i32>} : memref<256x64xf32, #tpu.memory_space<vmem>>, vector<256x64xf32>,
    } else {
    }
    %c256_i32 = arith.constant 256 : i32
    %3 = arith.muli %arg1, %c256_i32 : i32
    %4 = tpu.assume_multiple %3, 256 : i32
    %5 = arith.index_cast %4 : i32 to index
    %c0 = arith.constant 0 : index
    %6 = vector.load %arg3[%5, %c0] : memref<256x64xbf16, #tpu.memory_space<vmem>>, vector<256x64xbf16>
    %c0_1 = arith.constant 0 : index
    %c0_2 = arith.constant 0 : index
    %7 = vector.load %arg7[%c0_1, %c0_2] : memref<256x64xf32, #tpu.memory_space<vmem>>, vector<256x64xf32>
    %c0_3 = arith.constant 0 : index
    %c0_4 = arith.constant 0 : index
    %8 = vector.load %arg2[%c0_3, %c0_4] : memref<256x256xbf16, #tpu.memory_space<vmem>>, vector<256x256xbf16>
    %cst = arith.constant dense<0.000000e+00> : vector<256x64xf32>
    %9 = tpu.matmul %8, %6, %cst {dimension_numbers = #tpu.dot_dimension_numbers<[1], [0], [0], [1], [0, 0, 1, 1], [], []>} : vector<256x256xbf16>, vector<256x64xbf16>, vector<256x64xf32> -> vector<256x64xf32>
    %10 = arith.addf %7, %9 : vector<256x64xf32>
    %c0_5 = arith.constant 0 : index
    %c0_6 = arith.constant 0 : index
    %11 = vector.load %arg7[%c0_5, %c0_6] : memref<256x64xf32, #tpu.memory_space<vmem>>, vector<256x64xf32>
    tpu.vector_store %arg7[%c0_5, %c0_6], %10 {strides = array<i32>} : memref<256x64xf32, #tpu.memory_space<vmem>>, vector<256x64xf32>,
    %c0_i32_7 = arith.constant 0 : i32
    %12 = arith.cmpi eq, %arg1, %c0_i32_7 : i32
    %13 = arith.extui %12 : i1 to i32
    %c0_i32_8 = arith.constant 0 : i32
    %14 = arith.cmpi ne, %13, %c0_i32_8 : i32
    scf.if %14 {
      %c0_9 = arith.constant 0 : index
      %c0_10 = arith.constant 0 : index
      %15 = vector.load %arg7[%c0_9, %c0_10] : memref<256x64xf32, #tpu.memory_space<vmem>>, vector<256x64xf32>
      %c0_11 = arith.constant 0 : index
      %c0_12 = arith.constant 0 : index
      %16 = vector.load %arg4[%c0_11, %c0_12] : memref<64x128xf32, #tpu.memory_space<vmem>>, vector<64x128xf32>
      %cst_13 = arith.constant dense<0.000000e+00> : vector<256x128xf32>
      %17 = tpu.matmul %15, %16, %cst_13 {dimension_numbers = #tpu.dot_dimension_numbers<[1], [0], [0], [1], [0, 0, 1, 1], [], []>} : vector<256x64xf32>, vector<64x128xf32>, vector<256x128xf32> -> vector<256x128xf32>
      %c0_14 = arith.constant 0 : index
      %c0_15 = arith.constant 0 : index
      %18 = vector.load %arg5[%c0_14, %c0_15] : memref<1x128xf32, #tpu.memory_space<vmem>>, vector<1x128xf32>
      %19 = vector.broadcast %18 : vector<1x128xf32> to vector<256x128xf32>
      %20 = arith.addf %17, %19 : vector<256x128xf32>
      %cst_16 = arith.constant 0.000000e+00 : f32
      %21 = vector.broadcast %cst_16 : f32 to vector<256x128xf32>
      %22 = arith.maximumf %20, %21 : vector<256x128xf32>
      %23 = arith.truncf %22 : vector<256x128xf32> to vector<256x128xbf16>
      %c0_17 = arith.constant 0 : index
      %c0_18 = arith.constant 0 : index
      %24 = vector.load %arg6[%c0_17, %c0_18] : memref<256x128xbf16, #tpu.memory_space<vmem>>, vector<256x128xbf16>
      tpu.vector_store %arg6[%c0_17, %c0_18], %23 {strides = array<i32>} : memref<256x128xbf16, #tpu.memory_space<vmem>>, vector<256x128xbf16>,
    } else {
    }
    return
  }
  func.func @transform_0(%arg0: i32, %arg1: i32) -> (i32, i32) {
    %c0_i32 = arith.constant 0 : i32
    return %arg0, %arg1 : i32, i32
  }
  func.func @transform_1(%arg0: i32, %arg1: i32) -> (i32, i32) {
    %c0_i32 = arith.constant 0 : i32
    %c0_i32_0 = arith.constant 0 : i32
    %c0_i32_1 = arith.constant 0 : i32
    return %c0_i32, %c0_i32_0 : i32, i32
  }
  func.func @transform_2(%arg0: i32, %arg1: i32) -> (i32, i32) {
    %c0_i32 = arith.constant 0 : i32
    %c0_i32_0 = arith.constant 0 : i32
    %c0_i32_1 = arith.constant 0 : i32
    return %c0_i32, %c0_i32_0 : i32, i32
  }
  func.func @transform_3(%arg0: i32, %arg1: i32) -> (i32, i32) {
    %c0_i32 = arith.constant 0 : i32
    %c0_i32_0 = arith.constant 0 : i32
    %c0_i32_1 = arith.constant 0 : i32
    return %c0_i32, %c0_i32_0 : i32, i32
  }
  func.func @transform_4(%arg0: i32, %arg1: i32) -> (i32, i32) {
    %c0_i32 = arith.constant 0 : i32
    %c0_i32_0 = arith.constant 0 : i32
    return %arg0, %c0_i32 : i32, i32
  }
}

module attributes {stable_mosaic.version = 11 : i64} {
  func.func @_gcn_layer_kernel(%arg0: i32, %arg1: i32, %arg2: memref<256x256xbf16, #tpu.memory_space<vmem>>, %arg3: memref<256x128xbf16, #tpu.memory_space<vmem>>, %arg4: memref<128x128xf32, #tpu.memory_space<vmem>>, %arg5: memref<1x128xf32, #tpu.memory_space<vmem>>, %arg6: memref<256x128xf32, #tpu.memory_space<vmem>>, %arg7: memref<256x128xf32, #tpu.memory_space<vmem>>) attributes {dimension_semantics = [#tpu.dimension_semantics<parallel>, #tpu.dimension_semantics<arbitrary>], iteration_bounds = array<i64: 1, 1>, scalar_prefetch = 0 : i64, scratch_operands = 1 : i64, tpu.core_type = #tpu.core_type<tc>, window_params = [{transform_indices = @transform_0, window_bounds = array<i64: 256, 256>}, {pipeline_mode = #tpu.pipeline_mode<synchronous>, transform_indices = @transform_1, window_bounds = array<i64: 256, 128>}, {pipeline_mode = #tpu.pipeline_mode<synchronous>, transform_indices = @transform_2, window_bounds = array<i64: 128, 128>}, {pipeline_mode = #tpu.pipeline_mode<synchronous>, transform_indices = @transform_3, window_bounds = array<i64: 1, 128>}, {transform_indices = @transform_4, window_bounds = array<i64: 256, 128>}]} {
    %c0_i32 = arith.constant 0 : i32
    %0 = arith.cmpi eq, %arg1, %c0_i32 : i32
    %1 = arith.extui %0 : i1 to i32
    %c0_i32_0 = arith.constant 0 : i32
    %2 = arith.cmpi ne, %1, %c0_i32_0 : i32
    scf.if %2 {
      %cst_9 = arith.constant 0.000000e+00 : f32
      %15 = vector.broadcast %cst_9 : f32 to vector<256x128xf32>
      %c0_10 = arith.constant 0 : index
      %c0_11 = arith.constant 0 : index
      %16 = vector.load %arg7[%c0_10, %c0_11] : memref<256x128xf32, #tpu.memory_space<vmem>>, vector<256x128xf32>
      tpu.vector_store %arg7[%c0_10, %c0_11], %15 {strides = array<i32>} : memref<256x128xf32, #tpu.memory_space<vmem>>, vector<256x128xf32>,
    } else {
    }
    %c256_i32 = arith.constant 256 : i32
    %3 = arith.muli %arg1, %c256_i32 : i32
    %4 = tpu.assume_multiple %3, 256 : i32
    %5 = arith.index_cast %4 : i32 to index
    %c0 = arith.constant 0 : index
    %6 = vector.load %arg3[%5, %c0] : memref<256x128xbf16, #tpu.memory_space<vmem>>, vector<256x128xbf16>
    %c0_1 = arith.constant 0 : index
    %c0_2 = arith.constant 0 : index
    %7 = vector.load %arg7[%c0_1, %c0_2] : memref<256x128xf32, #tpu.memory_space<vmem>>, vector<256x128xf32>
    %c0_3 = arith.constant 0 : index
    %c0_4 = arith.constant 0 : index
    %8 = vector.load %arg2[%c0_3, %c0_4] : memref<256x256xbf16, #tpu.memory_space<vmem>>, vector<256x256xbf16>
    %cst = arith.constant dense<0.000000e+00> : vector<256x128xf32>
    %9 = tpu.matmul %8, %6, %cst {dimension_numbers = #tpu.dot_dimension_numbers<[1], [0], [0], [1], [0, 0, 1, 1], [], []>} : vector<256x256xbf16>, vector<256x128xbf16>, vector<256x128xf32> -> vector<256x128xf32>
    %10 = arith.addf %7, %9 : vector<256x128xf32>
    %c0_5 = arith.constant 0 : index
    %c0_6 = arith.constant 0 : index
    %11 = vector.load %arg7[%c0_5, %c0_6] : memref<256x128xf32, #tpu.memory_space<vmem>>, vector<256x128xf32>
    tpu.vector_store %arg7[%c0_5, %c0_6], %10 {strides = array<i32>} : memref<256x128xf32, #tpu.memory_space<vmem>>, vector<256x128xf32>,
    %c0_i32_7 = arith.constant 0 : i32
    %12 = arith.cmpi eq, %arg1, %c0_i32_7 : i32
    %13 = arith.extui %12 : i1 to i32
    %c0_i32_8 = arith.constant 0 : i32
    %14 = arith.cmpi ne, %13, %c0_i32_8 : i32
    scf.if %14 {
      %c0_9 = arith.constant 0 : index
      %c0_10 = arith.constant 0 : index
      %15 = vector.load %arg7[%c0_9, %c0_10] : memref<256x128xf32, #tpu.memory_space<vmem>>, vector<256x128xf32>
      %c0_11 = arith.constant 0 : index
      %c0_12 = arith.constant 0 : index
      %16 = vector.load %arg4[%c0_11, %c0_12] : memref<128x128xf32, #tpu.memory_space<vmem>>, vector<128x128xf32>
      %cst_13 = arith.constant dense<0.000000e+00> : vector<256x128xf32>
      %17 = tpu.matmul %15, %16, %cst_13 {dimension_numbers = #tpu.dot_dimension_numbers<[1], [0], [0], [1], [0, 0, 1, 1], [], []>} : vector<256x128xf32>, vector<128x128xf32>, vector<256x128xf32> -> vector<256x128xf32>
      %c0_14 = arith.constant 0 : index
      %c0_15 = arith.constant 0 : index
      %18 = vector.load %arg5[%c0_14, %c0_15] : memref<1x128xf32, #tpu.memory_space<vmem>>, vector<1x128xf32>
      %19 = vector.broadcast %18 : vector<1x128xf32> to vector<256x128xf32>
      %20 = arith.addf %17, %19 : vector<256x128xf32>
      %21 = arith.mulf %20, %20 : vector<256x128xf32>
      %cst_16 = arith.constant dense<0.000000e+00> : vector<256xf32>
      %22 = vector.multi_reduction <add>, %21, %cst_16 [1] : vector<256x128xf32> to vector<256xf32>
      %23 = vector.shape_cast %22 : vector<256xf32> to vector<256x1xf32>
      %cst_17 = arith.constant 9.99999996E-13 : f32
      %24 = vector.broadcast %cst_17 : f32 to vector<256x1xf32>
      %25 = arith.addf %23, %24 : vector<256x1xf32>
      %26 = math.rsqrt %25 : vector<256x1xf32>
      %27 = vector.broadcast %26 : vector<256x1xf32> to vector<256x128xf32>
      %28 = arith.mulf %20, %27 : vector<256x128xf32>
      %c0_18 = arith.constant 0 : index
      %c0_19 = arith.constant 0 : index
      %29 = vector.load %arg6[%c0_18, %c0_19] : memref<256x128xf32, #tpu.memory_space<vmem>>, vector<256x128xf32>
      tpu.vector_store %arg6[%c0_18, %c0_19], %28 {strides = array<i32>} : memref<256x128xf32, #tpu.memory_space<vmem>>, vector<256x128xf32>,
    } else {
    }
    return
  }
  func.func @transform_0(%arg0: i32, %arg1: i32) -> (i32, i32) {
    %c0_i32 = arith.constant 0 : i32
    return %arg0, %arg1 : i32, i32
  }
  func.func @transform_1(%arg0: i32, %arg1: i32) -> (i32, i32) {
    %c0_i32 = arith.constant 0 : i32
    %c0_i32_0 = arith.constant 0 : i32
    %c0_i32_1 = arith.constant 0 : i32
    return %c0_i32, %c0_i32_0 : i32, i32
  }
  func.func @transform_2(%arg0: i32, %arg1: i32) -> (i32, i32) {
    %c0_i32 = arith.constant 0 : i32
    %c0_i32_0 = arith.constant 0 : i32
    %c0_i32_1 = arith.constant 0 : i32
    return %c0_i32, %c0_i32_0 : i32, i32
  }
  func.func @transform_3(%arg0: i32, %arg1: i32) -> (i32, i32) {
    %c0_i32 = arith.constant 0 : i32
    %c0_i32_0 = arith.constant 0 : i32
    %c0_i32_1 = arith.constant 0 : i32
    return %c0_i32, %c0_i32_0 : i32, i32
  }
  func.func @transform_4(%arg0: i32, %arg1: i32) -> (i32, i32) {
    %c0_i32 = arith.constant 0 : i32
    %c0_i32_0 = arith.constant 0 : i32
    return %arg0, %c0_i32 : i32, i32
  }
}

</mosaic_0001>

<llo_original>
// kernel: gnn_forward.3
$region0: #{gnn_forward.3}
  #allocation0 [shape = 'u32[]', space=smem, size = 0x4, offset = 0x4, fixed_abs, tag = 'smem constant byte address 0x4 - core index']
  #allocation1 [shape = 'u32[144,128]{1,0:T(1,128)}', space=vmem, size = 0x12000, scoped, tag = 'internal scratch']
  #allocation2 [shape = 'f32[256,128]{1,0:T(8,128)}', space=vmem, size = 0x20000, scoped, tag = 'scratch operand']
  %s0 = inlined_call_operand.vmem [shape: bf16[256,256], index: 0, kind: input, shape index: {}]
  %s1 = inlined_call_operand.vmem [shape: bf16[256,128], index: 1, kind: input, shape index: {}]
  %s2 = inlined_call_operand.vmem [shape: f32[128,128], index: 2, kind: input, shape index: {}]
  %s3 = inlined_call_operand.vmem [shape: f32[1,128], index: 3, kind: input, shape index: {}]
  %s4 = inlined_call_operand.vmem [shape: f32[256,128], index: 4, kind: output, shape index: {}]
  %s5 = sld [smem:[#allocation0]]
  $region34: #{gnn_forward.3} parent=0
    _
  %s7 = ssub.s32 1, %s5
  %s8 = scalar_select 0, %s7, %s5
  // Predicated region
  $region2: #{gnn_forward.3} parent=0 // pred_check
    _
  $region3: #{gnn_forward.3} parent=0 // pred_check_branch
    %10 = sbr.rel (0) target = $region5
  $region4: #{gnn_forward.3} parent=0 // pred_region
    _
  $region5: #{gnn_forward.3} parent=0 // pred_fallthru
    _
  // Predicated region
  $region6: #{gnn_forward.3} parent=0 // pred_check
    _
  $region7: #{gnn_forward.3} parent=0 // pred_check_branch
    %12 = sbr.rel (0) target = $region9
  $region8: #{gnn_forward.3} parent=0 // pred_region
    _
  $region9: #{gnn_forward.3} parent=0 // pred_fallthru
    _
  // Predicated region
  $region10: #{gnn_forward.3} parent=0 // pred_check
    _
  $region11: #{gnn_forward.3} parent=0 // pred_check_branch
    %14 = sbr.rel (0) target = $region13
  $region12: #{gnn_forward.3} parent=0 // pred_region
    _
  $region13: #{gnn_forward.3} parent=0 // pred_fallthru
    _
  // Predicated region
  $region14: #{gnn_forward.3} parent=0 // pred_check
    _
  $region15: #{gnn_forward.3} parent=0 // pred_check_branch
    %16 = sbr.rel (0) target = $region17
  $region16: #{gnn_forward.3} parent=0 // pred_region
    _
  $region17: #{gnn_forward.3} parent=0 // pred_fallthru
    _
  %p18 = scmp.eq.s32.totalorder 0, 0
  // Predicated region
  $region18: #{gnn_forward.3} parent=0 // pred_check
    %p19 = pneg %p18
  $region19: #{gnn_forward.3} parent=0 // pred_check_branch
    %21 = sbr.rel (%p19) target = $region21
  $region20: #{gnn_forward.3} parent=0 // pred_region
    %22 = vst [vmem:[#allocation2] sm:$0xff] 0.0
    %23 = vst [vmem:[#allocation2 + $0x8] sm:$0xff] 0.0
    %24 = vst [vmem:[#allocation2 + $0x10] sm:$0xff] 0.0
    %25 = vst [vmem:[#allocation2 + $0x18] sm:$0xff] 0.0
    %26 = vst [vmem:[#allocation2 + $0x20] sm:$0xff] 0.0
    %27 = vst [vmem:[#allocation2 + $0x28] sm:$0xff] 0.0
    %28 = vst [vmem:[#allocation2 + $0x30] sm:$0xff] 0.0
    %29 = vst [vmem:[#allocation2 + $0x38] sm:$0xff] 0.0
    %30 = vst [vmem:[#allocation2 + $0x40] sm:$0xff] 0.0
    %31 = vst [vmem:[#allocation2 + $0x48] sm:$0xff] 0.0
    %32 = vst [vmem:[#allocation2 + $0x50] sm:$0xff] 0.0
    %33 = vst [vmem:[#allocation2 + $0x58] sm:$0xff] 0.0
    %34 = vst [vmem:[#allocation2 + $0x60] sm:$0xff] 0.0
    %35 = vst [vmem:[#allocation2 + $0x68] sm:$0xff] 0.0
    %36 = vst [vmem:[#allocation2 + $0x70] sm:$0xff] 0.0
    %37 = vst [vmem:[#allocation2 + $0x78] sm:$0xff] 0.0
    %38 = vst [vmem:[#allocation2 + $0x80] sm:$0xff] 0.0
    %39 = vst [vmem:[#allocation2 + $0x88] sm:$0xff] 0.0
    %40 = vst [vmem:[#allocation2 + $0x90] sm:$0xff] 0.0
    %41 = vst [vmem:[#allocation2 + $0x98] sm:$0xff] 0.0
    %42 = vst [vmem:[#allocation2 + $0xa0] sm:$0xff] 0.0
    %43 = vst [vmem:[#allocation2 + $0xa8] sm:$0xff] 0.0
    %44 = vst [vmem:[#allocation2 + $0xb0] sm:$0xff] 0.0
    %45 = vst [vmem:[#allocation2 + $0xb8] sm:$0xff] 0.0
    %46 = vst [vmem:[#allocation2 + $0xc0] sm:$0xff] 0.0
    %47 = vst [vmem:[#allocation2 + $0xc8] sm:$0xff] 0.0
    %48 = vst [vmem:[#allocation2 + $0xd0] sm:$0xff] 0.0
    %49 = vst [vmem:[#allocation2 + $0xd8] sm:$0xff] 0.0
    %50 = vst [vmem:[#allocation2 + $0xe0] sm:$0xff] 0.0
    %51 = vst [vmem:[#allocation2 + $0xe8] sm:$0xff] 0.0
    %52 = vst [vmem:[#allocation2 + $0xf0] sm:$0xff] 0.0
    %53 = vst [vmem:[#allocation2 + $0xf8] sm:$0xff] 0.0
  $region21: #{gnn_forward.3} parent=0 // pred_fallthru
    _
  %s54 = smul.u32 0, 256
  %s55 = sshra.s32 %s54, 3
  %s56 = sand.u32 %s54, 7
  %s57 = smul.addr %s55, 4
  %s58 = scalar_lea.vmem %s1, %s57
  %v59 = vld [vmem:[%s58] sm:$0xf]
  %v60 = vld [vmem:[%s58 + $0x4] sm:$0xf]
  %v61 = vld [vmem:[%s58 + $0x8] sm:$0xf]
  %v62 = vld [vmem:[%s58 + $0xc] sm:$0xf]
  %v63 = vld [vmem:[%s58 + $0x10] sm:$0xf]
  %v64 = vld [vmem:[%s58 + $0x14] sm:$0xf]
  %v65 = vld [vmem:[%s58 + $0x18] sm:$0xf]
  %v66 = vld [vmem:[%s58 + $0x1c] sm:$0xf]
  %v67 = vld [vmem:[%s58 + $0x20] sm:$0xf]
  %v68 = vld [vmem:[%s58 + $0x24] sm:$0xf]
  %v69 = vld [vmem:[%s58 + $0x28] sm:$0xf]
  %v70 = vld [vmem:[%s58 + $0x2c] sm:$0xf]
  %v71 = vld [vmem:[%s58 + $0x30] sm:$0xf]
  %v72 = vld [vmem:[%s58 + $0x34] sm:$0xf]
  %v73 = vld [vmem:[%s58 + $0x38] sm:$0xf]
  %v74 = vld [vmem:[%s58 + $0x3c] sm:$0xf]
  %v75 = vld [vmem:[%s58 + $0x40] sm:$0xf]
  %v76 = vld [vmem:[%s58 + $0x44] sm:$0xf]
  %v77 = vld [vmem:[%s58 + $0x48] sm:$0xf]
  %v78 = vld [vmem:[%s58 + $0x4c] sm:$0xf]
  %v79 = vld [vmem:[%s58 + $0x50] sm:$0xf]
  %v80 = vld [vmem:[%s58 + $0x54] sm:$0xf]
  %v81 = vld [vmem:[%s58 + $0x58] sm:$0xf]
  %v82 = vld [vmem:[%s58 + $0x5c] sm:$0xf]
  %v83 = vld [vmem:[%s58 + $0x60] sm:$0xf]
  %v84 = vld [vmem:[%s58 + $0x64] sm:$0xf]
  %v85 = vld [vmem:[%s58 + $0x68] sm:$0xf]
  %v86 = vld [vmem:[%s58 + $0x6c] sm:$0xf]
  %v87 = vld [vmem:[%s58 + $0x70] sm:$0xf]
  %v88 = vld [vmem:[%s58 + $0x74] sm:$0xf]
  %v89 = vld [vmem:[%s58 + $0x78] sm:$0xf]
  %v90 = vld [vmem:[%s58 + $0x7c] sm:$0xf]
  %v91 = vld [vmem:[#allocation2] sm:$0xff]
  %v92 = vld [vmem:[#allocation2 + $0x8] sm:$0xff]
  %v93 = vld [vmem:[#allocation2 + $0x10] sm:$0xff]
  %v94 = vld [vmem:[#allocation2 + $0x18] sm:$0xff]
  %v95 = vld [vmem:[#allocation2 + $0x20] sm:$0xff]
  %v96 = vld [vmem:[#allocation2 + $0x28] sm:$0xff]
  %v97 = vld [vmem:[#allocation2 + $0x30] sm:$0xff]
  %v98 = vld [vmem:[#allocation2 + $0x38] sm:$0xff]
  %v99 = vld [vmem:[#allocation2 + $0x40] sm:$0xff]
  %v100 = vld [vmem:[#allocation2 + $0x48] sm:$0xff]
  %v101 = vld [vmem:[#allocation2 + $0x50] sm:$0xff]
  %v102 = vld [vmem:[#allocation2 + $0x58] sm:$0xff]
  %v103 = vld [vmem:[#allocation2 + $0x60] sm:$0xff]
  %v104 = vld [vmem:[#allocation2 + $0x68] sm:$0xff]
  %v105 = vld [vmem:[#allocation2 + $0x70] sm:$0xff]
  %v106 = vld [vmem:[#allocation2 + $0x78] sm:$0xff]
  %v107 = vld [vmem:[#allocation2 + $0x80] sm:$0xff]
  %v108 = vld [vmem:[#allocation2 + $0x88] sm:$0xff]
  %v109 = vld [vmem:[#allocation2 + $0x90] sm:$0xff]
  %v110 = vld [vmem:[#allocation2 + $0x98] sm:$0xff]
  %v111 = vld [vmem:[#allocation2 + $0xa0] sm:$0xff]
  %v112 = vld [vmem:[#allocation2 + $0xa8] sm:$0xff]
  %v113 = vld [vmem:[#allocation2 + $0xb0] sm:$0xff]
  %v114 = vld [vmem:[#allocation2 + $0xb8] sm:$0xff]
  %v115 = vld [vmem:[#allocation2 + $0xc0] sm:$0xff]
  %v116 = vld [vmem:[#allocation2 + $0xc8] sm:$0xff]
  %v117 = vld [vmem:[#allocation2 + $0xd0] sm:$0xff]
  %v118 = vld [vmem:[#allocation2 + $0xd8] sm:$0xff]
  %v119 = vld [vmem:[#allocation2 + $0xe0] sm:$0xff]
  %v120 = vld [vmem:[#allocation2 + $0xe8] sm:$0xff]
  %v121 = vld [vmem:[#allocation2 + $0xf0] sm:$0xff]
  %v122 = vld [vmem:[#allocation2 + $0xf8] sm:$0xff]
  %v123 = vld [vmem:[%s0] sm:$0xff]
  %v124 = vld [vmem:[%s0 + $0x8] sm:$0xff]
  %v125 = vld [vmem:[%s0 + $0x10] sm:$0xff]
  %v126 = vld [vmem:[%s0 + $0x18] sm:$0xff]
  %v127 = vld [vmem:[%s0 + $0x20] sm:$0xff]
  %v128 = vld [vmem:[%s0 + $0x28] sm:$0xff]
  %v129 = vld [vmem:[%s0 + $0x30] sm:$0xff]
  %v130 = vld [vmem:[%s0 + $0x38] sm:$0xff]
  %v131 = vld [vmem:[%s0 + $0x40] sm:$0xff]
  %v132 = vld [vmem:[%s0 + $0x48] sm:$0xff]
  %v133 = vld [vmem:[%s0 + $0x50] sm:$0xff]
  %v134 = vld [vmem:[%s0 + $0x58] sm:$0xff]
  %v135 = vld [vmem:[%s0 + $0x60] sm:$0xff]
  %v136 = vld [vmem:[%s0 + $0x68] sm:$0xff]
  %v137 = vld [vmem:[%s0 + $0x70] sm:$0xff]
  %v138 = vld [vmem:[%s0 + $0x78] sm:$0xff]
  %v139 = vld [vmem:[%s0 + $0x80] sm:$0xff]
  %v140 = vld [vmem:[%s0 + $0x88] sm:$0xff]
  %v141 = vld [vmem:[%s0 + $0x90] sm:$0xff]
  %v142 = vld [vmem:[%s0 + $0x98] sm:$0xff]
  %v143 = vld [vmem:[%s0 + $0xa0] sm:$0xff]
  %v144 = vld [vmem:[%s0 + $0xa8] sm:$0xff]
  %v145 = vld [vmem:[%s0 + $0xb0] sm:$0xff]
  %v146 = vld [vmem:[%s0 + $0xb8] sm:$0xff]
  %v147 = vld [vmem:[%s0 + $0xc0] sm:$0xff]
  %v148 = vld [vmem:[%s0 + $0xc8] sm:$0xff]
  %v149 = vld [vmem:[%s0 + $0xd0] sm:$0xff]
  %v150 = vld [vmem:[%s0 + $0xd8] sm:$0xff]
  %v151 = vld [vmem:[%s0 + $0xe0] sm:$0xff]
  %v152 = vld [vmem:[%s0 + $0xe8] sm:$0xff]
  %v153 = vld [vmem:[%s0 + $0xf0] sm:$0xff]
  %v154 = vld [vmem:[%s0 + $0xf8] sm:$0xff]
  %v187 = vunpack.c.l.b16 %v123
  %v188 = vunpack.c.h.b16 %v123
  %v189 = vunpack.c.l.b16 %v124
  %v190 = vunpack.c.h.b16 %v124
  %v191 = vunpack.c.l.b16 %v125
  %v192 = vunpack.c.h.b16 %v125
  %v193 = vunpack.c.l.b16 %v126
  %v194 = vunpack.c.h.b16 %v126
  %v195 = vunpack.c.l.b16 %v127
  %v196 = vunpack.c.h.b16 %v127
  %v197 = vunpack.c.l.b16 %v128
  %v198 = vunpack.c.h.b16 %v128
  %v199 = vunpack.c.l.b16 %v129
  %v200 = vunpack.c.h.b16 %v129
  %v201 = vunpack.c.l.b16 %v130
  %v202 = vunpack.c.h.b16 %v130
  %v203 = vunpack.c.l.b16 %v131
  %v204 = vunpack.c.h.b16 %v131
  %v205 = vunpack.c.l.b16 %v132
  %v206 = vunpack.c.h.b16 %v132
  %v207 = vunpack.c.l.b16 %v133
  %v208 = vunpack.c.h.b16 %v133
  %v209 = vunpack.c.l.b16 %v134
  %v210 = vunpack.c.h.b16 %v134
  %v211 = vunpack.c.l.b16 %v135
  %v212 = vunpack.c.h.b16 %v135
  %v213 = vunpack.c.l.b16 %v136
  %v214 = vunpack.c.h.b16 %v136
  %v215 = vunpack.c.l.b16 %v137
  %v216 = vunpack.c.h.b16 %v137
  %v217 = vunpack.c.l.b16 %v138
  %v218 = vunpack.c.h.b16 %v138
  %v219 = vunpack.c.l.b16 %v139
  %v220 = vunpack.c.h.b16 %v139
  %v221 = vunpack.c.l.b16 %v140
  %v222 = vunpack.c.h.b16 %v140
  %v223 = vunpack.c.l.b16 %v141
  %v224 = vunpack.c.h.b16 %v141
  %v225 = vunpack.c.l.b16 %v142
  %v226 = vunpack.c.h.b16 %v142
  %v227 = vunpack.c.l.b16 %v143
  %v228 = vunpack.c.h.b16 %v143
  %v229 = vunpack.c.l.b16 %v144
  %v230 = vunpack.c.h.b16 %v144
  %v231 = vunpack.c.l.b16 %v145
  %v232 = vunpack.c.h.b16 %v145
  %v233 = vunpack.c.l.b16 %v146
  %v234 = vunpack.c.h.b16 %v146
  %v235 = vunpack.c.l.b16 %v147
  %v236 = vunpack.c.h.b16 %v147
  %v237 = vunpack.c.l.b16 %v148
  %v238 = vunpack.c.h.b16 %v148
  %v239 = vunpack.c.l.b16 %v149
  %v240 = vunpack.c.h.b16 %v149
  %v241 = vunpack.c.l.b16 %v150
  %v242 = vunpack.c.h.b16 %v150
  %v243 = vunpack.c.l.b16 %v151
  %v244 = vunpack.c.h.b16 %v151
  %v245 = vunpack.c.l.b16 %v152
  %v246 = vunpack.c.h.b16 %v152
  %v247 = vunpack.c.l.b16 %v153
  %v248 = vunpack.c.h.b16 %v153
  %v249 = vunpack.c.l.b16 %v154
  %v250 = vunpack.c.h.b16 %v154
  %v251 = vpack.c.b16 %v189, %v187
  %v252 = vpack.c.b16 %v190, %v188
  %v253 = vpack.c.b16 %v193, %v191
  %v254 = vpack.c.b16 %v194, %v192
  %v255 = vpack.c.b16 %v197, %v195
  %v256 = vpack.c.b16 %v198, %v196
  %v257 = vpack.c.b16 %v201, %v199
  %v258 = vpack.c.b16 %v202, %v200
  %v259 = vpack.c.b16 %v205, %v203
  %v260 = vpack.c.b16 %v206, %v204
  %v261 = vpack.c.b16 %v209, %v207
  %v262 = vpack.c.b16 %v210, %v208
  %v263 = vpack.c.b16 %v213, %v211
  %v264 = vpack.c.b16 %v214, %v212
  %v265 = vpack.c.b16 %v217, %v215
  %v266 = vpack.c.b16 %v218, %v216
  %v267 = vpack.c.b16 %v221, %v219
  %v268 = vpack.c.b16 %v222, %v220
  %v269 = vpack.c.b16 %v225, %v223
  %v270 = vpack.c.b16 %v226, %v224
  %v271 = vpack.c.b16 %v229, %v227
  %v272 = vpack.c.b16 %v230, %v228
  %v273 = vpack.c.b16 %v233, %v231
  %v274 = vpack.c.b16 %v234, %v232
  %v275 = vpack.c.b16 %v237, %v235
  %v276 = vpack.c.b16 %v238, %v236
  %v277 = vpack.c.b16 %v241, %v239
  %v278 = vpack.c.b16 %v242, %v240
  %v279 = vpack.c.b16 %v245, %v243
  %v280 = vpack.c.b16 %v246, %v244
  %v281 = vpack.c.b16 %v249, %v247
  %v282 = vpack.c.b16 %v250, %v248
  %v347 = vunpack.c.l.b16 %v59
  %v348 = vunpack.c.l.b16 %v60
  %v349 = vunpack.c.l.b16 %v61
  %v350 = vunpack.c.l.b16 %v62
  %v351 = vunpack.c.l.b16 %v63
  %v352 = vunpack.c.l.b16 %v64
  %v353 = vunpack.c.l.b16 %v65
  %v354 = vunpack.c.l.b16 %v66
  %v355 = vunpack.c.l.b16 %v67
  %v356 = vunpack.c.l.b16 %v68
  %v357 = vunpack.c.l.b16 %v69
  %v358 = vunpack.c.l.b16 %v70
  %v359 = vunpack.c.l.b16 %v71
  %v360 = vunpack.c.l.b16 %v72
  %v361 = vunpack.c.l.b16 %v73
  %v362 = vunpack.c.l.b16 %v74
  %v363 = vunpack.c.l.b16 %v75
  %v364 = vunpack.c.l.b16 %v76
  %v365 = vunpack.c.l.b16 %v77
  %v366 = vunpack.c.l.b16 %v78
  %v367 = vunpack.c.l.b16 %v79
  %v368 = vunpack.c.l.b16 %v80
  %v369 = vunpack.c.l.b16 %v81
  %v370 = vunpack.c.l.b16 %v82
  %v371 = vunpack.c.l.b16 %v83
  %v372 = vunpack.c.l.b16 %v84
  %v373 = vunpack.c.l.b16 %v85
  %v374 = vunpack.c.l.b16 %v86
  %v375 = vunpack.c.l.b16 %v87
  %v376 = vunpack.c.l.b16 %v88
  %v377 = vunpack.c.l.b16 %v89
  %v378 = vunpack.c.l.b16 %v90
  %v379 = vpack.c.b16 %v348, %v347
  %v380 = vpack.c.b16 %v350, %v349
  %v381 = vpack.c.b16 %v352, %v351
  %v382 = vpack.c.b16 %v354, %v353
  %v383 = vpack.c.b16 %v356, %v355
  %v384 = vpack.c.b16 %v358, %v357
  %v385 = vpack.c.b16 %v360, %v359
  %v386 = vpack.c.b16 %v362, %v361
  %v387 = vpack.c.b16 %v364, %v363
  %v388 = vpack.c.b16 %v366, %v365
  %v389 = vpack.c.b16 %v368, %v367
  %v390 = vpack.c.b16 %v370, %v369
  %v391 = vpack.c.b16 %v372, %v371
  %v392 = vpack.c.b16 %v374, %v373
  %v393 = vpack.c.b16 %v376, %v375
  %v394 = vpack.c.b16 %v378, %v377
  %411 = vmatprep.subr.bf16.mxu0 0
  %412 = vmatpush1.bf16.msra.mxu0 %v386
  %413 = vmatprep.subr.bf16.mxu0 0
  %414 = vmatpush1.bf16.msra.mxu0 %v385
  %415 = vmatprep.subr.bf16.mxu0 0
  %416 = vmatpush1.bf16.msra.mxu0 %v384
  %417 = vmatprep.subr.bf16.mxu0 0
  %418 = vmatpush1.bf16.msra.mxu0 %v383
  %419 = vmatprep.subr.bf16.mxu0 0
  %420 = vmatpush1.bf16.msra.mxu0 %v382
  %421 = vmatprep.subr.bf16.mxu0 0
  %422 = vmatpush1.bf16.msra.mxu0 %v381
  %423 = vmatprep.subr.bf16.mxu0 0
  %424 = vmatpush1.bf16.msra.mxu0 %v380
  %425 = vmatprep.subr.bf16.mxu0 0
  %426 = vmatpush1.bf16.msra.mxu0 %v379
  %427 = vmatprep.subr.bf16.mxu0 0
  %428 = vmatpush2.bf16.msra.mxu0 %v394
  %429 = vmatprep.subr.bf16.mxu0 0
  %430 = vmatpush2.bf16.msra.mxu0 %v393
  %431 = vmatprep.subr.bf16.mxu0 0
  %432 = vmatpush2.bf16.msra.mxu0 %v392
  %433 = vmatprep.subr.bf16.mxu0 0
  %434 = vmatpush2.bf16.msra.mxu0 %v391
  %435 = vmatprep.subr.bf16.mxu0 0
  %436 = vmatpush2.bf16.msra.mxu0 %v390
  %437 = vmatprep.subr.bf16.mxu0 0
  %438 = vmatpush2.bf16.msra.mxu0 %v389
  %439 = vmatprep.subr.bf16.mxu0 0
  %440 = vmatpush2.bf16.msra.mxu0 %v388
  %441 = vmatprep.subr.bf16.mxu0 0
  %442 = vmatpush2.bf16.msra.mxu0 %v387
  %443 = vmatprep.mubr.bf16.mxu0 %v252
  %444 = vmatmul.mubr.bf16.gmra.mxu0 %v251
  %v445 = vpop.f32.mrf.mxu0
  %v446 = vadd.f32 0.0, %v445
  %v447 = vpop.f32.mrf.mxu0
  %v448 = vpop.f32.mrf.mxu0
  %v449 = vadd.f32 0.0, %v448
  %v450 = vpop.f32.mrf.mxu0
  %451 = vmatprep.mubr.bf16.mxu0 %v254
  %452 = vmatmul.mubr.bf16.gmra.mxu0 %v253
  %v453 = vpop.f32.mrf.mxu0
  %v454 = vadd.f32 0.0, %v453
  %v455 = vpop.f32.mrf.mxu0
  %v456 = vpop.f32.mrf.mxu0
  %v457 = vadd.f32 0.0, %v456
  %v458 = vpop.f32.mrf.mxu0
  %459 = vmatprep.mubr.bf16.mxu0 %v256
  %460 = vmatmul.mubr.bf16.gmra.mxu0 %v255
  %v461 = vpop.f32.mrf.mxu0
  %v462 = vadd.f32 0.0, %v461
  %v463 = vpop.f32.mrf.mxu0
  %v464 = vpop.f32.mrf.mxu0
  %v465 = vadd.f32 0.0, %v464
  %v466 = vpop.f32.mrf.mxu0
  %467 = vmatprep.mubr.bf16.mxu0 %v258
  %468 = vmatmul.mubr.bf16.gmra.mxu0 %v257
  %v469 = vpop.f32.mrf.mxu0
  %v470 = vadd.f32 0.0, %v469
  %v471 = vpop.f32.mrf.mxu0
  %v472 = vpop.f32.mrf.mxu0
  %v473 = vadd.f32 0.0, %v472
  %v474 = vpop.f32.mrf.mxu0
  %475 = vmatprep.mubr.bf16.mxu0 %v260
  %476 = vmatmul.mubr.bf16.gmra.mxu0 %v259
  %v477 = vpop.f32.mrf.mxu0
  %v478 = vadd.f32 0.0, %v477
  %v479 = vpop.f32.mrf.mxu0
  %v480 = vpop.f32.mrf.mxu0
  %v481 = vadd.f32 0.0, %v480
  %v482 = vpop.f32.mrf.mxu0
  %483 = vmatprep.mubr.bf16.mxu0 %v262
  %484 = vmatmul.mubr.bf16.gmra.mxu0 %v261
  %v485 = vpop.f32.mrf.mxu0
  %v486 = vadd.f32 0.0, %v485
  %v487 = vpop.f32.mrf.mxu0
  %v488 = vpop.f32.mrf.mxu0
  %v489 = vadd.f32 0.0, %v488
  %v490 = vpop.f32.mrf.mxu0
  %491 = vmatprep.mubr.bf16.mxu0 %v264
  %492 = vmatmul.mubr.bf16.gmra.mxu0 %v263
  %v493 = vpop.f32.mrf.mxu0
  %v494 = vadd.f32 0.0, %v493
  %v495 = vpop.f32.mrf.mxu0
  %v496 = vpop.f32.mrf.mxu0
  %v497 = vadd.f32 0.0, %v496
  %v498 = vpop.f32.mrf.mxu0
  %499 = vmatprep.mubr.bf16.mxu0 %v266
  %500 = vmatmul.mubr.bf16.gmra.mxu0 %v265
  %v501 = vpop.f32.mrf.mxu0
  %v502 = vadd.f32 0.0, %v501
  %v503 = vpop.f32.mrf.mxu0
  %v504 = vpop.f32.mrf.mxu0
  %v505 = vadd.f32 0.0, %v504
  %v506 = vpop.f32.mrf.mxu0
  %507 = vmatprep.mubr.bf16.mxu0 %v268
  %508 = vmatmul.mubr.bf16.gmra.mxu0 %v267
  %v509 = vpop.f32.mrf.mxu0
  %v510 = vadd.f32 0.0, %v509
  %v511 = vpop.f32.mrf.mxu0
  %v512 = vpop.f32.mrf.mxu0
  %v513 = vadd.f32 0.0, %v512
  %v514 = vpop.f32.mrf.mxu0
  %515 = vmatprep.mubr.bf16.mxu0 %v270
  %516 = vmatmul.mubr.bf16.gmra.mxu0 %v269
  %v517 = vpop.f32.mrf.mxu0
  %v518 = vadd.f32 0.0, %v517
  %v519 = vpop.f32.mrf.mxu0
  %v520 = vpop.f32.mrf.mxu0
  %v521 = vadd.f32 0.0, %v520
  %v522 = vpop.f32.mrf.mxu0
  %523 = vmatprep.mubr.bf16.mxu0 %v272
  %524 = vmatmul.mubr.bf16.gmra.mxu0 %v271
  %v525 = vpop.f32.mrf.mxu0
  %v526 = vadd.f32 0.0, %v525
  %v527 = vpop.f32.mrf.mxu0
  %v528 = vpop.f32.mrf.mxu0
  %v529 = vadd.f32 0.0, %v528
  %v530 = vpop.f32.mrf.mxu0
  %531 = vmatprep.mubr.bf16.mxu0 %v274
  %532 = vmatmul.mubr.bf16.gmra.mxu0 %v273
  %v533 = vpop.f32.mrf.mxu0
  %v534 = vadd.f32 0.0, %v533
  %v535 = vpop.f32.mrf.mxu0
  %v536 = vpop.f32.mrf.mxu0
  %v537 = vadd.f32 0.0, %v536
  %v538 = vpop.f32.mrf.mxu0
  %539 = vmatprep.mubr.bf16.mxu0 %v276
  %540 = vmatmul.mubr.bf16.gmra.mxu0 %v275
  %v541 = vpop.f32.mrf.mxu0
  %v542 = vadd.f32 0.0, %v541
  %v543 = vpop.f32.mrf.mxu0
  %v544 = vpop.f32.mrf.mxu0
  %v545 = vadd.f32 0.0, %v544
  %v546 = vpop.f32.mrf.mxu0
  %547 = vmatprep.mubr.bf16.mxu0 %v278
  %548 = vmatmul.mubr.bf16.gmra.mxu0 %v277
  %v549 = vpop.f32.mrf.mxu0
  %v550 = vadd.f32 0.0, %v549
  %v551 = vpop.f32.mrf.mxu0
  %v552 = vpop.f32.mrf.mxu0
  %v553 = vadd.f32 0.0, %v552
  %v554 = vpop.f32.mrf.mxu0
  %555 = vmatprep.mubr.bf16.mxu0 %v280
  %556 = vmatmul.mubr.bf16.gmra.mxu0 %v279
  %v557 = vpop.f32.mrf.mxu0
  %v558 = vadd.f32 0.0, %v557
  %v559 = vpop.f32.mrf.mxu0
  %v560 = vpop.f32.mrf.mxu0
  %v561 = vadd.f32 0.0, %v560
  %v562 = vpop.f32.mrf.mxu0
  %563 = vmatprep.mubr.bf16.mxu0 %v282
  %564 = vmatmul.mubr.bf16.gmra.mxu0 %v281
  %v565 = vpop.f32.mrf.mxu0
  %v566 = vadd.f32 0.0, %v565
  %v567 = vpop.f32.mrf.mxu0
  %v568 = vpop.f32.mrf.mxu0
  %v569 = vadd.f32 0.0, %v568
  %v570 = vpop.f32.mrf.mxu0
  %571 = vdwg.mxu0
  %v572 = vadd.f32 %v91, %v446
  %v573 = vadd.f32 %v92, %v449
  %v574 = vadd.f32 %v93, %v454
  %v575 = vadd.f32 %v94, %v457
  %v576 = vadd.f32 %v95, %v462
  %v577 = vadd.f32 %v96, %v465
  %v578 = vadd.f32 %v97, %v470
  %v579 = vadd.f32 %v98, %v473
  %v580 = vadd.f32 %v99, %v478
  %v581 = vadd.f32 %v100, %v481
  %v582 = vadd.f32 %v101, %v486
  %v583 = vadd.f32 %v102, %v489
  %v584 = vadd.f32 %v103, %v494
  %v585 = vadd.f32 %v104, %v497
  %v586 = vadd.f32 %v105, %v502
  %v587 = vadd.f32 %v106, %v505
  %v588 = vadd.f32 %v107, %v510
  %v589 = vadd.f32 %v108, %v513
  %v590 = vadd.f32 %v109, %v518
  %v591 = vadd.f32 %v110, %v521
  %v592 = vadd.f32 %v111, %v526
  %v593 = vadd.f32 %v112, %v529
  %v594 = vadd.f32 %v113, %v534
  %v595 = vadd.f32 %v114, %v537
  %v596 = vadd.f32 %v115, %v542
  %v597 = vadd.f32 %v116, %v545
  %v598 = vadd.f32 %v117, %v550
  %v599 = vadd.f32 %v118, %v553
  %v600 = vadd.f32 %v119, %v558
  %v601 = vadd.f32 %v120, %v561
  %v602 = vadd.f32 %v121, %v566
  %v603 = vadd.f32 %v122, %v569
  %604 = vst [vmem:[#allocation2] sm:$0xff] %v572
  %605 = vst [vmem:[#allocation2 + $0x8] sm:$0xff] %v573
  %606 = vst [vmem:[#allocation2 + $0x10] sm:$0xff] %v574
  %607 = vst [vmem:[#allocation2 + $0x18] sm:$0xff] %v575
  %608 = vst [vmem:[#allocation2 + $0x20] sm:$0xff] %v576
  %609 = vst [vmem:[#allocation2 + $0x28] sm:$0xff] %v577
  %610 = vst [vmem:[#allocation2 + $0x30] sm:$0xff] %v578
  %611 = vst [vmem:[#allocation2 + $0x38] sm:$0xff] %v579
  %612 = vst [vmem:[#allocation2 + $0x40] sm:$0xff] %v580
  %613 = vst [vmem:[#allocation2 + $0x48] sm:$0xff] %v581
  %614 = vst [vmem:[#allocation2 + $0x50] sm:$0xff] %v582
  %615 = vst [vmem:[#allocation2 + $0x58] sm:$0xff] %v583
  %616 = vst [vmem:[#allocation2 + $0x60] sm:$0xff] %v584
  %617 = vst [vmem:[#allocation2 + $0x68] sm:$0xff] %v585
  %618 = vst [vmem:[#allocation2 + $0x70] sm:$0xff] %v586
  %619 = vst [vmem:[#allocation2 + $0x78] sm:$0xff] %v587
  %620 = vst [vmem:[#allocation2 + $0x80] sm:$0xff] %v588
  %621 = vst [vmem:[#allocation2 + $0x88] sm:$0xff] %v589
  %622 = vst [vmem:[#allocation2 + $0x90] sm:$0xff] %v590
  %623 = vst [vmem:[#allocation2 + $0x98] sm:$0xff] %v591
  %624 = vst [vmem:[#allocation2 + $0xa0] sm:$0xff] %v592
  %625 = vst [vmem:[#allocation2 + $0xa8] sm:$0xff] %v593
  %626 = vst [vmem:[#allocation2 + $0xb0] sm:$0xff] %v594
  %627 = vst [vmem:[#allocation2 + $0xb8] sm:$0xff] %v595
  %628 = vst [vmem:[#allocation2 + $0xc0] sm:$0xff] %v596
  %629 = vst [vmem:[#allocation2 + $0xc8] sm:$0xff] %v597
  %630 = vst [vmem:[#allocation2 + $0xd0] sm:$0xff] %v598
  %631 = vst [vmem:[#allocation2 + $0xd8] sm:$0xff] %v599
  %632 = vst [vmem:[#allocation2 + $0xe0] sm:$0xff] %v600
  %633 = vst [vmem:[#allocation2 + $0xe8] sm:$0xff] %v601
  %634 = vst [vmem:[#allocation2 + $0xf0] sm:$0xff] %v602
  %635 = vst [vmem:[#allocation2 + $0xf8] sm:$0xff] %v603
  // Predicated region
  $region22: #{gnn_forward.3} parent=0 // pred_check
    %p636 = pneg %p18
  $region23: #{gnn_forward.3} parent=0 // pred_check_branch
    %638 = sbr.rel (%p636) target = $region25
  $region24: #{gnn_forward.3} parent=0 // pred_region
    %v639 = vld [vmem:[#allocation2] sm:$0xff]
    %v640 = vld [vmem:[#allocation2 + $0x8] sm:$0xff]
    %v641 = vld [vmem:[#allocation2 + $0x10] sm:$0xff]
    %v642 = vld [vmem:[#allocation2 + $0x18] sm:$0xff]
    %v643 = vld [vmem:[#allocation2 + $0x20] sm:$0xff]
    %v644 = vld [vmem:[#allocation2 + $0x28] sm:$0xff]
    %v645 = vld [vmem:[#allocation2 + $0x30] sm:$0xff]
    %v646 = vld [vmem:[#allocation2 + $0x38] sm:$0xff]
    %v647 = vld [vmem:[#allocation2 + $0x40] sm:$0xff]
    %v648 = vld [vmem:[#allocation2 + $0x48] sm:$0xff]
    %v649 = vld [vmem:[#allocation2 + $0x50] sm:$0xff]
    %v650 = vld [vmem:[#allocation2 + $0x58] sm:$0xff]
    %v651 = vld [vmem:[#allocation2 + $0x60] sm:$0xff]
    %v652 = vld [vmem:[#allocation2 + $0x68] sm:$0xff]
    %v653 = vld [vmem:[#allocation2 + $0x70] sm:$0xff]
    %v654 = vld [vmem:[#allocation2 + $0x78] sm:$0xff]
    %v655 = vld [vmem:[#allocation2 + $0x80] sm:$0xff]
    %v656 = vld [vmem:[#allocation2 + $0x88] sm:$0xff]
    %v657 = vld [vmem:[#allocation2 + $0x90] sm:$0xff]
    %v658 = vld [vmem:[#allocation2 + $0x98] sm:$0xff]
    %v659 = vld [vmem:[#allocation2 + $0xa0] sm:$0xff]
    %v660 = vld [vmem:[#allocation2 + $0xa8] sm:$0xff]
    %v661 = vld [vmem:[#allocation2 + $0xb0] sm:$0xff]
    %v662 = vld [vmem:[#allocation2 + $0xb8] sm:$0xff]
    %v663 = vld [vmem:[#allocation2 + $0xc0] sm:$0xff]
    %v664 = vld [vmem:[#allocation2 + $0xc8] sm:$0xff]
    %v665 = vld [vmem:[#allocation2 + $0xd0] sm:$0xff]
    %v666 = vld [vmem:[#allocation2 + $0xd8] sm:$0xff]
    %v667 = vld [vmem:[#allocation2 + $0xe0] sm:$0xff]
    %v668 = vld [vmem:[#allocation2 + $0xe8] sm:$0xff]
    %v669 = vld [vmem:[#allocation2 + $0xf0] sm:$0xff]
    %v670 = vld [vmem:[#allocation2 + $0xf8] sm:$0xff]
    %v671 = vld [vmem:[%s2] sm:$0xff]
    %v672 = vld [vmem:[%s2 + $0x8] sm:$0xff]
    %v673 = vld [vmem:[%s2 + $0x10] sm:$0xff]
    %v674 = vld [vmem:[%s2 + $0x18] sm:$0xff]
    %v675 = vld [vmem:[%s2 + $0x20] sm:$0xff]
    %v676 = vld [vmem:[%s2 + $0x28] sm:$0xff]
    %v677 = vld [vmem:[%s2 + $0x30] sm:$0xff]
    %v678 = vld [vmem:[%s2 + $0x38] sm:$0xff]
    %v679 = vld [vmem:[%s2 + $0x40] sm:$0xff]
    %v680 = vld [vmem:[%s2 + $0x48] sm:$0xff]
    %v681 = vld [vmem:[%s2 + $0x50] sm:$0xff]
    %v682 = vld [vmem:[%s2 + $0x58] sm:$0xff]
    %v683 = vld [vmem:[%s2 + $0x60] sm:$0xff]
    %v684 = vld [vmem:[%s2 + $0x68] sm:$0xff]
    %v685 = vld [vmem:[%s2 + $0x70] sm:$0xff]
    %v686 = vld [vmem:[%s2 + $0x78] sm:$0xff]
    %v687 = vld [vmem:[%s3] sm:$0x1]
    %v689 = vlaneseq
    %v690 = vshrl.u32 %v689, 7
    %v691 = vsub.s32 0, %v690
    %v692 = vrot.slane %v687, %v691
    %694 = vmatprep.subr.mxu0 0.0
    %695 = vmatpush1.msra.mxu0 %v686
    %696 = vmatprep.subr.mxu0 0.0
    %697 = vmatpush1.msra.mxu0 %v685
    %698 = vmatprep.subr.mxu0 0.0
    %699 = vmatpush1.msra.mxu0 %v684
    %700 = vmatprep.subr.mxu0 0.0
    %701 = vmatpush1.msra.mxu0 %v683
    %702 = vmatprep.subr.mxu0 0.0
    %703 = vmatpush1.msra.mxu0 %v682
    %704 = vmatprep.subr.mxu0 0.0
    %705 = vmatpush1.msra.mxu0 %v681
    %706 = vmatprep.subr.mxu0 0.0
    %707 = vmatpush1.msra.mxu0 %v680
    %708 = vmatprep.subr.mxu0 0.0
    %709 = vmatpush1.msra.mxu0 %v679
    %710 = vmatprep.subr.mxu0 0.0
    %711 = vmatpush1.msra.mxu0 %v678
    %712 = vmatprep.subr.mxu0 0.0
    %713 = vmatpush1.msra.mxu0 %v677
    %714 = vmatprep.subr.mxu0 0.0
    %715 = vmatpush1.msra.mxu0 %v676
    %716 = vmatprep.subr.mxu0 0.0
    %717 = vmatpush1.msra.mxu0 %v675
    %718 = vmatprep.subr.mxu0 0.0
    %719 = vmatpush1.msra.mxu0 %v674
    %720 = vmatprep.subr.mxu0 0.0
    %721 = vmatpush1.msra.mxu0 %v673
    %722 = vmatprep.subr.mxu0 0.0
    %723 = vmatpush1.msra.mxu0 %v672
    %724 = vmatprep.subr.mxu0 0.0
    %725 = vmatpush1.msra.mxu0 %v671
    %726 = vmatprep.subr.mxu0 0.0
    %727 = vmatpush2.msra.mxu0 0.0
    %728 = vmatprep.subr.mxu0 0.0
    %729 = vmatpush2.msra.mxu0 0.0
    %730 = vmatprep.subr.mxu0 0.0
    %731 = vmatpush2.msra.mxu0 0.0
    %732 = vmatprep.subr.mxu0 0.0
    %733 = vmatpush2.msra.mxu0 0.0
    %734 = vmatprep.subr.mxu0 0.0
    %735 = vmatpush2.msra.mxu0 0.0
    %736 = vmatprep.subr.mxu0 0.0
    %737 = vmatpush2.msra.mxu0 0.0
    %738 = vmatprep.subr.mxu0 0.0
    %739 = vmatpush2.msra.mxu0 0.0
    %740 = vmatprep.subr.mxu0 0.0
    %741 = vmatpush2.msra.mxu0 0.0
    %742 = vmatprep.subr.mxu0 0.0
    %743 = vmatpush2.msra.mxu0 0.0
    %744 = vmatprep.subr.mxu0 0.0
    %745 = vmatpush2.msra.mxu0 0.0
    %746 = vmatprep.subr.mxu0 0.0
    %747 = vmatpush2.msra.mxu0 0.0
    %748 = vmatprep.subr.mxu0 0.0
    %749 = vmatpush2.msra.mxu0 0.0
    %750 = vmatprep.subr.mxu0 0.0
    %751 = vmatpush2.msra.mxu0 0.0
    %752 = vmatprep.subr.mxu0 0.0
    %753 = vmatpush2.msra.mxu0 0.0
    %754 = vmatprep.subr.mxu0 0.0
    %755 = vmatpush2.msra.mxu0 0.0
    %756 = vmatprep.subr.mxu0 0.0
    %757 = vmatpush2.msra.mxu0 0.0
    %758 = vmatprep.mubr.f32.mxu0 0.0
    %759 = vmatmul.mubr.f32.gmra.mxu0 %v639
    %v760 = vpop.f32.mrf.mxu0
    %v761 = vadd.f32 %v692, %v760
    %v762 = vpop.f32.mrf.mxu0
    %763 = vmatprep.mubr.f32.mxu0 0.0
    %764 = vmatmul.mubr.f32.gmra.mxu0 %v640
    %v765 = vpop.f32.mrf.mxu0
    %v766 = vadd.f32 %v692, %v765
    %v767 = vpop.f32.mrf.mxu0
    %768 = vmatprep.mubr.f32.mxu0 0.0
    %769 = vmatmul.mubr.f32.gmra.mxu0 %v641
    %v770 = vpop.f32.mrf.mxu0
    %v771 = vadd.f32 %v692, %v770
    %v772 = vpop.f32.mrf.mxu0
    %773 = vmatprep.mubr.f32.mxu0 0.0
    %774 = vmatmul.mubr.f32.gmra.mxu0 %v642
    %v775 = vpop.f32.mrf.mxu0
    %v776 = vadd.f32 %v692, %v775
    %v777 = vpop.f32.mrf.mxu0
    %778 = vmatprep.mubr.f32.mxu0 0.0
    %779 = vmatmul.mubr.f32.gmra.mxu0 %v643
    %v780 = vpop.f32.mrf.mxu0
    %v781 = vadd.f32 %v692, %v780
    %v782 = vpop.f32.mrf.mxu0
    %783 = vmatprep.mubr.f32.mxu0 0.0
    %784 = vmatmul.mubr.f32.gmra.mxu0 %v644
    %v785 = vpop.f32.mrf.mxu0
    %v786 = vadd.f32 %v692, %v785
    %v787 = vpop.f32.mrf.mxu0
    %788 = vmatprep.mubr.f32.mxu0 0.0
    %789 = vmatmul.mubr.f32.gmra.mxu0 %v645
    %v790 = vpop.f32.mrf.mxu0
    %v791 = vadd.f32 %v692, %v790
    %v792 = vpop.f32.mrf.mxu0
    %793 = vmatprep.mubr.f32.mxu0 0.0
    %794 = vmatmul.mubr.f32.gmra.mxu0 %v646
    %v795 = vpop.f32.mrf.mxu0
    %v796 = vadd.f32 %v692, %v795
    %v797 = vpop.f32.mrf.mxu0
    %798 = vmatprep.mubr.f32.mxu0 0.0
    %799 = vmatmul.mubr.f32.gmra.mxu0 %v647
    %v800 = vpop.f32.mrf.mxu0
    %v801 = vadd.f32 %v692, %v800
    %v802 = vpop.f32.mrf.mxu0
    %803 = vmatprep.mubr.f32.mxu0 0.0
    %804 = vmatmul.mubr.f32.gmra.mxu0 %v648
    %v805 = vpop.f32.mrf.mxu0
    %v806 = vadd.f32 %v692, %v805
    %v807 = vpop.f32.mrf.mxu0
    %808 = vmatprep.mubr.f32.mxu0 0.0
    %809 = vmatmul.mubr.f32.gmra.mxu0 %v649
    %v810 = vpop.f32.mrf.mxu0
    %v811 = vadd.f32 %v692, %v810
    %v812 = vpop.f32.mrf.mxu0
    %813 = vmatprep.mubr.f32.mxu0 0.0
    %814 = vmatmul.mubr.f32.gmra.mxu0 %v650
    %v815 = vpop.f32.mrf.mxu0
    %v816 = vadd.f32 %v692, %v815
    %v817 = vpop.f32.mrf.mxu0
    %818 = vmatprep.mubr.f32.mxu0 0.0
    %819 = vmatmul.mubr.f32.gmra.mxu0 %v651
    %v820 = vpop.f32.mrf.mxu0
    %v821 = vadd.f32 %v692, %v820
    %v822 = vpop.f32.mrf.mxu0
    %823 = vmatprep.mubr.f32.mxu0 0.0
    %824 = vmatmul.mubr.f32.gmra.mxu0 %v652
    %v825 = vpop.f32.mrf.mxu0
    %v826 = vadd.f32 %v692, %v825
    %v827 = vpop.f32.mrf.mxu0
    %828 = vmatprep.mubr.f32.mxu0 0.0
    %829 = vmatmul.mubr.f32.gmra.mxu0 %v653
    %v830 = vpop.f32.mrf.mxu0
    %v831 = vadd.f32 %v692, %v830
    %v832 = vpop.f32.mrf.mxu0
    %833 = vmatprep.mubr.f32.mxu0 0.0
    %834 = vmatmul.mubr.f32.gmra.mxu0 %v654
    %v835 = vpop.f32.mrf.mxu0
    %v836 = vadd.f32 %v692, %v835
    %v837 = vpop.f32.mrf.mxu0
    %838 = vmatprep.mubr.f32.mxu0 0.0
    %839 = vmatmul.mubr.f32.gmra.mxu0 %v655
    %v840 = vpop.f32.mrf.mxu0
    %v841 = vadd.f32 %v692, %v840
    %v842 = vpop.f32.mrf.mxu0
    %843 = vmatprep.mubr.f32.mxu0 0.0
    %844 = vmatmul.mubr.f32.gmra.mxu0 %v656
    %v845 = vpop.f32.mrf.mxu0
    %v846 = vadd.f32 %v692, %v845
    %v847 = vpop.f32.mrf.mxu0
    %848 = vmatprep.mubr.f32.mxu0 0.0
    %849 = vmatmul.mubr.f32.gmra.mxu0 %v657
    %v850 = vpop.f32.mrf.mxu0
    %v851 = vadd.f32 %v692, %v850
    %v852 = vpop.f32.mrf.mxu0
    %853 = vmatprep.mubr.f32.mxu0 0.0
    %854 = vmatmul.mubr.f32.gmra.mxu0 %v658
    %v855 = vpop.f32.mrf.mxu0
    %v856 = vadd.f32 %v692, %v855
    %v857 = vpop.f32.mrf.mxu0
    %858 = vmatprep.mubr.f32.mxu0 0.0
    %859 = vmatmul.mubr.f32.gmra.mxu0 %v659
    %v860 = vpop.f32.mrf.mxu0
    %v861 = vadd.f32 %v692, %v860
    %v862 = vpop.f32.mrf.mxu0
    %863 = vmatprep.mubr.f32.mxu0 0.0
    %864 = vmatmul.mubr.f32.gmra.mxu0 %v660
    %v865 = vpop.f32.mrf.mxu0
    %v866 = vadd.f32 %v692, %v865
    %v867 = vpop.f32.mrf.mxu0
    %868 = vmatprep.mubr.f32.mxu0 0.0
    %869 = vmatmul.mubr.f32.gmra.mxu0 %v661
    %v870 = vpop.f32.mrf.mxu0
    %v871 = vadd.f32 %v692, %v870
    %v872 = vpop.f32.mrf.mxu0
    %873 = vmatprep.mubr.f32.mxu0 0.0
    %874 = vmatmul.mubr.f32.gmra.mxu0 %v662
    %v875 = vpop.f32.mrf.mxu0
    %v876 = vadd.f32 %v692, %v875
    %v877 = vpop.f32.mrf.mxu0
    %878 = vmatprep.mubr.f32.mxu0 0.0
    %879 = vmatmul.mubr.f32.gmra.mxu0 %v663
    %v880 = vpop.f32.mrf.mxu0
    %v881 = vadd.f32 %v692, %v880
    %v882 = vpop.f32.mrf.mxu0
    %883 = vmatprep.mubr.f32.mxu0 0.0
    %884 = vmatmul.mubr.f32.gmra.mxu0 %v664
    %v885 = vpop.f32.mrf.mxu0
    %v886 = vadd.f32 %v692, %v885
    %v887 = vpop.f32.mrf.mxu0
    %888 = vmatprep.mubr.f32.mxu0 0.0
    %889 = vmatmul.mubr.f32.gmra.mxu0 %v665
    %v890 = vpop.f32.mrf.mxu0
    %v891 = vadd.f32 %v692, %v890
    %v892 = vpop.f32.mrf.mxu0
    %893 = vmatprep.mubr.f32.mxu0 0.0
    %894 = vmatmul.mubr.f32.gmra.mxu0 %v666
    %v895 = vpop.f32.mrf.mxu0
    %v896 = vadd.f32 %v692, %v895
    %v897 = vpop.f32.mrf.mxu0
    %898 = vmatprep.mubr.f32.mxu0 0.0
    %899 = vmatmul.mubr.f32.gmra.mxu0 %v667
    %v900 = vpop.f32.mrf.mxu0
    %v901 = vadd.f32 %v692, %v900
    %v902 = vpop.f32.mrf.mxu0
    %903 = vmatprep.mubr.f32.mxu0 0.0
    %904 = vmatmul.mubr.f32.gmra.mxu0 %v668
    %v905 = vpop.f32.mrf.mxu0
    %v906 = vadd.f32 %v692, %v905
    %v907 = vpop.f32.mrf.mxu0
    %908 = vmatprep.mubr.f32.mxu0 0.0
    %909 = vmatmul.mubr.f32.gmra.mxu0 %v669
    %v910 = vpop.f32.mrf.mxu0
    %v911 = vadd.f32 %v692, %v910
    %v912 = vpop.f32.mrf.mxu0
    %913 = vmatprep.mubr.f32.mxu0 0.0
    %914 = vmatmul.mubr.f32.gmra.mxu0 %v670
    %v915 = vpop.f32.mrf.mxu0
    %v916 = vadd.f32 %v692, %v915
    %v917 = vpop.f32.mrf.mxu0
    %918 = vdwg.mxu0
    %v919 = vmul.f32 %v761, %v761
    %v920 = vmul.f32 %v766, %v766
    %v921 = vmul.f32 %v771, %v771
    %v922 = vmul.f32 %v776, %v776
    %v923 = vmul.f32 %v781, %v781
    %v924 = vmul.f32 %v786, %v786
    %v925 = vmul.f32 %v791, %v791
    %v926 = vmul.f32 %v796, %v796
    %v927 = vmul.f32 %v801, %v801
    %v928 = vmul.f32 %v806, %v806
    %v929 = vmul.f32 %v811, %v811
    %v930 = vmul.f32 %v816, %v816
    %v931 = vmul.f32 %v821, %v821
    %v932 = vmul.f32 %v826, %v826
    %v933 = vmul.f32 %v831, %v831
    %v934 = vmul.f32 %v836, %v836
    %v935 = vmul.f32 %v841, %v841
    %v936 = vmul.f32 %v846, %v846
    %v937 = vmul.f32 %v851, %v851
    %v938 = vmul.f32 %v856, %v856
    %v939 = vmul.f32 %v861, %v861
    %v940 = vmul.f32 %v866, %v866
    %v941 = vmul.f32 %v871, %v871
    %v942 = vmul.f32 %v876, %v876
    %v943 = vmul.f32 %v881, %v881
    %v944 = vmul.f32 %v886, %v886
    %v945 = vmul.f32 %v891, %v891
    %v946 = vmul.f32 %v896, %v896
    %v947 = vmul.f32 %v901, %v901
    %v948 = vmul.f32 %v906, %v906
    %v949 = vmul.f32 %v911, %v911
    %v950 = vmul.f32 %v916, %v916
    %951 = vadd.xlane.f32.xlu0 %v919
    %v952 = vpop.xlane.xlu0 %951
    %953 = vadd.xlane.f32.xlu0 %v920
    %v954 = vpop.xlane.xlu0 %953
    %955 = vadd.xlane.f32.xlu0 %v921
    %v956 = vpop.xlane.xlu0 %955
    %957 = vadd.xlane.f32.xlu0 %v922
    %v958 = vpop.xlane.xlu0 %957
    %959 = vadd.xlane.f32.xlu0 %v923
    %v960 = vpop.xlane.xlu0 %959
    %961 = vadd.xlane.f32.xlu0 %v924
    %v962 = vpop.xlane.xlu0 %961
    %963 = vadd.xlane.f32.xlu0 %v925
    %v964 = vpop.xlane.xlu0 %963
    %965 = vadd.xlane.f32.xlu0 %v926
    %v966 = vpop.xlane.xlu0 %965
    %967 = vadd.xlane.f32.xlu0 %v927
    %v968 = vpop.xlane.xlu0 %967
    %969 = vadd.xlane.f32.xlu0 %v928
    %v970 = vpop.xlane.xlu0 %969
    %971 = vadd.xlane.f32.xlu0 %v929
    %v972 = vpop.xlane.xlu0 %971
    %973 = vadd.xlane.f32.xlu0 %v930
    %v974 = vpop.xlane.xlu0 %973
    %975 = vadd.xlane.f32.xlu0 %v931
    %v976 = vpop.xlane.xlu0 %975
    %977 = vadd.xlane.f32.xlu0 %v932
    %v978 = vpop.xlane.xlu0 %977
    %979 = vadd.xlane.f32.xlu0 %v933
    %v980 = vpop.xlane.xlu0 %979
    %981 = vadd.xlane.f32.xlu0 %v934
    %v982 = vpop.xlane.xlu0 %981
    %983 = vadd.xlane.f32.xlu0 %v935
    %v984 = vpop.xlane.xlu0 %983
    %985 = vadd.xlane.f32.xlu0 %v936
    %v986 = vpop.xlane.xlu0 %985
    %987 = vadd.xlane.f32.xlu0 %v937
    %v988 = vpop.xlane.xlu0 %987
    %989 = vadd.xlane.f32.xlu0 %v938
    %v990 = vpop.xlane.xlu0 %989
    %991 = vadd.xlane.f32.xlu0 %v939
    %v992 = vpop.xlane.xlu0 %991
    %993 = vadd.xlane.f32.xlu0 %v940
    %v994 = vpop.xlane.xlu0 %993
    %995 = vadd.xlane.f32.xlu0 %v941
    %v996 = vpop.xlane.xlu0 %995
    %997 = vadd.xlane.f32.xlu0 %v942
    %v998 = vpop.xlane.xlu0 %997
    %999 = vadd.xlane.f32.xlu0 %v943
    %v1000 = vpop.xlane.xlu0 %999
    %1001 = vadd.xlane.f32.xlu0 %v944
    %v1002 = vpop.xlane.xlu0 %1001
    %1003 = vadd.xlane.f32.xlu0 %v945
    %v1004 = vpop.xlane.xlu0 %1003
    %1005 = vadd.xlane.f32.xlu0 %v946
    %v1006 = vpop.xlane.xlu0 %1005
    %1007 = vadd.xlane.f32.xlu0 %v947
    %v1008 = vpop.xlane.xlu0 %1007
    %1009 = vadd.xlane.f32.xlu0 %v948
    %v1010 = vpop.xlane.xlu0 %1009
    %1011 = vadd.xlane.f32.xlu0 %v949
    %v1012 = vpop.xlane.xlu0 %1011
    %1013 = vadd.xlane.f32.xlu0 %v950
    %v1014 = vpop.xlane.xlu0 %1013
    %v1015 = vadd.f32 %v952, 1e-12
    %v1016 = vadd.f32 %v954, 1e-12
    %v1017 = vadd.f32 %v956, 1e-12
    %v1018 = vadd.f32 %v958, 1e-12
    %v1019 = vadd.f32 %v960, 1e-12
    %v1020 = vadd.f32 %v962, 1e-12
    %v1021 = vadd.f32 %v964, 1e-12
    %v1022 = vadd.f32 %v966, 1e-12
    %v1023 = vadd.f32 %v968, 1e-12
    %v1024 = vadd.f32 %v970, 1e-12
    %v1025 = vadd.f32 %v972, 1e-12
    %v1026 = vadd.f32 %v974, 1e-12
    %v1027 = vadd.f32 %v976, 1e-12
    %v1028 = vadd.f32 %v978, 1e-12
    %v1029 = vadd.f32 %v980, 1e-12
    %v1030 = vadd.f32 %v982, 1e-12
    %v1031 = vadd.f32 %v984, 1e-12
    %v1032 = vadd.f32 %v986, 1e-12
    %v1033 = vadd.f32 %v988, 1e-12
    %v1034 = vadd.f32 %v990, 1e-12
    %v1035 = vadd.f32 %v992, 1e-12
    %v1036 = vadd.f32 %v994, 1e-12
    %v1037 = vadd.f32 %v996, 1e-12
    %v1038 = vadd.f32 %v998, 1e-12
    %v1039 = vadd.f32 %v1000, 1e-12
    %v1040 = vadd.f32 %v1002, 1e-12
    %v1041 = vadd.f32 %v1004, 1e-12
    %v1042 = vadd.f32 %v1006, 1e-12
    %v1043 = vadd.f32 %v1008, 1e-12
    %v1044 = vadd.f32 %v1010, 1e-12
    %v1045 = vadd.f32 %v1012, 1e-12
    %v1046 = vadd.f32 %v1014, 1e-12
    %v1047 = vrsqrt.pop %v1015
    %v1048 = vrsqrt.pop %v1016
    %v1049 = vrsqrt.pop %v1017
    %v1050 = vrsqrt.pop %v1018
    %v1051 = vrsqrt.pop %v1019
    %v1052 = vrsqrt.pop %v1020
    %v1053 = vrsqrt.pop %v1021
    %v1054 = vrsqrt.pop %v1022
    %v1055 = vrsqrt.pop %v1023
    %v1056 = vrsqrt.pop %v1024
    %v1057 = vrsqrt.pop %v1025
    %v1058 = vrsqrt.pop %v1026
    %v1059 = vrsqrt.pop %v1027
    %v1060 = vrsqrt.pop %v1028
    %v1061 = vrsqrt.pop %v1029
    %v1062 = vrsqrt.pop %v1030
    %v1063 = vrsqrt.pop %v1031
    %v1064 = vrsqrt.pop %v1032
    %v1065 = vrsqrt.pop %v1033
    %v1066 = vrsqrt.pop %v1034
    %v1067 = vrsqrt.pop %v1035
    %v1068 = vrsqrt.pop %v1036
    %v1069 = vrsqrt.pop %v1037
    %v1070 = vrsqrt.pop %v1038
    %v1071 = vrsqrt.pop %v1039
    %v1072 = vrsqrt.pop %v1040
    %v1073 = vrsqrt.pop %v1041
    %v1074 = vrsqrt.pop %v1042
    %v1075 = vrsqrt.pop %v1043
    %v1076 = vrsqrt.pop %v1044
    %v1077 = vrsqrt.pop %v1045
    %v1078 = vrsqrt.pop %v1046
    %v1079 = vmul.f32 %v761, %v1047
    %v1080 = vmul.f32 %v766, %v1048
    %v1081 = vmul.f32 %v771, %v1049
    %v1082 = vmul.f32 %v776, %v1050
    %v1083 = vmul.f32 %v781, %v1051
    %v1084 = vmul.f32 %v786, %v1052
    %v1085 = vmul.f32 %v791, %v1053
    %v1086 = vmul.f32 %v796, %v1054
    %v1087 = vmul.f32 %v801, %v1055
    %v1088 = vmul.f32 %v806, %v1056
    %v1089 = vmul.f32 %v811, %v1057
    %v1090 = vmul.f32 %v816, %v1058
    %v1091 = vmul.f32 %v821, %v1059
    %v1092 = vmul.f32 %v826, %v1060
    %v1093 = vmul.f32 %v831, %v1061
    %v1094 = vmul.f32 %v836, %v1062
    %v1095 = vmul.f32 %v841, %v1063
    %v1096 = vmul.f32 %v846, %v1064
    %v1097 = vmul.f32 %v851, %v1065
    %v1098 = vmul.f32 %v856, %v1066
    %v1099 = vmul.f32 %v861, %v1067
    %v1100 = vmul.f32 %v866, %v1068
    %v1101 = vmul.f32 %v871, %v1069
    %v1102 = vmul.f32 %v876, %v1070
    %v1103 = vmul.f32 %v881, %v1071
    %v1104 = vmul.f32 %v886, %v1072
    %v1105 = vmul.f32 %v891, %v1073
    %v1106 = vmul.f32 %v896, %v1074
    %v1107 = vmul.f32 %v901, %v1075
    %v1108 = vmul.f32 %v906, %v1076
    %v1109 = vmul.f32 %v911, %v1077
    %v1110 = vmul.f32 %v916, %v1078
    %1111 = vst [vmem:[%s4] sm:$0xff] %v1079
    %1112 = vst [vmem:[%s4 + $0x8] sm:$0xff] %v1080
    %1113 = vst [vmem:[%s4 + $0x10] sm:$0xff] %v1081
    %1114 = vst [vmem:[%s4 + $0x18] sm:$0xff] %v1082
    %1115 = vst [vmem:[%s4 + $0x20] sm:$0xff] %v1083
    %1116 = vst [vmem:[%s4 + $0x28] sm:$0xff] %v1084
    %1117 = vst [vmem:[%s4 + $0x30] sm:$0xff] %v1085
    %1118 = vst [vmem:[%s4 + $0x38] sm:$0xff] %v1086
    %1119 = vst [vmem:[%s4 + $0x40] sm:$0xff] %v1087
    %1120 = vst [vmem:[%s4 + $0x48] sm:$0xff] %v1088
    %1121 = vst [vmem:[%s4 + $0x50] sm:$0xff] %v1089
    %1122 = vst [vmem:[%s4 + $0x58] sm:$0xff] %v1090
    %1123 = vst [vmem:[%s4 + $0x60] sm:$0xff] %v1091
    %1124 = vst [vmem:[%s4 + $0x68] sm:$0xff] %v1092
    %1125 = vst [vmem:[%s4 + $0x70] sm:$0xff] %v1093
    %1126 = vst [vmem:[%s4 + $0x78] sm:$0xff] %v1094
    %1127 = vst [vmem:[%s4 + $0x80] sm:$0xff] %v1095
    %1128 = vst [vmem:[%s4 + $0x88] sm:$0xff] %v1096
    %1129 = vst [vmem:[%s4 + $0x90] sm:$0xff] %v1097
    %1130 = vst [vmem:[%s4 + $0x98] sm:$0xff] %v1098
    %1131 = vst [vmem:[%s4 + $0xa0] sm:$0xff] %v1099
    %1132 = vst [vmem:[%s4 + $0xa8] sm:$0xff] %v1100
    %1133 = vst [vmem:[%s4 + $0xb0] sm:$0xff] %v1101
    %1134 = vst [vmem:[%s4 + $0xb8] sm:$0xff] %v1102
    %1135 = vst [vmem:[%s4 + $0xc0] sm:$0xff] %v1103
    %1136 = vst [vmem:[%s4 + $0xc8] sm:$0xff] %v1104
    %1137 = vst [vmem:[%s4 + $0xd0] sm:$0xff] %v1105
    %1138 = vst [vmem:[%s4 + $0xd8] sm:$0xff] %v1106
    %1139 = vst [vmem:[%s4 + $0xe0] sm:$0xff] %v1107
    %1140 = vst [vmem:[%s4 + $0xe8] sm:$0xff] %v1108
    %1141 = vst [vmem:[%s4 + $0xf0] sm:$0xff] %v1109
    %1142 = vst [vmem:[%s4 + $0xf8] sm:$0xff] %v1110
  $region25: #{gnn_forward.3} parent=0 // pred_fallthru
    _
  // Predicated region
  $region26: #{gnn_forward.3} parent=0 // pred_check
    _
  $region27: #{gnn_forward.3} parent=0 // pred_check_branch
    %1144 = sbr.rel (0) target = $region29
  $region28: #{gnn_forward.3} parent=0 // pred_region
    _
  $region29: #{gnn_forward.3} parent=0 // pred_fallthru
    _
  // Predicated region
  $region30: #{gnn_forward.3} parent=0 // pred_check
    _
  $region31: #{gnn_forward.3} parent=0 // pred_check_branch
    %1146 = sbr.rel (0) target = $region33
  $region32: #{gnn_forward.3} parent=0 // pred_region
    _
  $region33: #{gnn_forward.3} parent=0 // pred_fallthru
    _

// kernel: gnn_forward.2
$region0: #{gnn_forward.2}
  #allocation0 [shape = 'u32[]', space=smem, size = 0x4, offset = 0x4, fixed_abs, tag = 'smem constant byte address 0x4 - core index']
  #allocation1 [shape = 'u32[144,128]{1,0:T(1,128)}', space=vmem, size = 0x12000, scoped, tag = 'internal scratch']
  #allocation2 [shape = 'f32[256,64]{1,0:T(8,128)}', space=vmem, size = 0x20000, scoped, tag = 'scratch operand']
  %s0 = inlined_call_operand.vmem [shape: bf16[256,256], index: 0, kind: input, shape index: {}]
  %s1 = inlined_call_operand.vmem [shape: bf16[256,64], index: 1, kind: input, shape index: {}]
  %s2 = inlined_call_operand.vmem [shape: f32[64,128], index: 2, kind: input, shape index: {}]
  %s3 = inlined_call_operand.vmem [shape: f32[1,128], index: 3, kind: input, shape index: {}]
  %s4 = inlined_call_operand.vmem [shape: bf16[256,128], index: 4, kind: output, shape index: {}]
  %s5 = sld [smem:[#allocation0]]
  $region34: #{gnn_forward.2} parent=0
    _
  %s7 = ssub.s32 1, %s5
  %s8 = scalar_select 0, %s7, %s5
  // Predicated region
  $region2: #{gnn_forward.2} parent=0 // pred_check
    _
  $region3: #{gnn_forward.2} parent=0 // pred_check_branch
    %10 = sbr.rel (0) target = $region5
  $region4: #{gnn_forward.2} parent=0 // pred_region
    _
  $region5: #{gnn_forward.2} parent=0 // pred_fallthru
    _
  // Predicated region
  $region6: #{gnn_forward.2} parent=0 // pred_check
    _
  $region7: #{gnn_forward.2} parent=0 // pred_check_branch
    %12 = sbr.rel (0) target = $region9
  $region8: #{gnn_forward.2} parent=0 // pred_region
    _
  $region9: #{gnn_forward.2} parent=0 // pred_fallthru
    _
  // Predicated region
  $region10: #{gnn_forward.2} parent=0 // pred_check
    _
  $region11: #{gnn_forward.2} parent=0 // pred_check_branch
    %14 = sbr.rel (0) target = $region13
  $region12: #{gnn_forward.2} parent=0 // pred_region
    _
  $region13: #{gnn_forward.2} parent=0 // pred_fallthru
    _
  // Predicated region
  $region14: #{gnn_forward.2} parent=0 // pred_check
    _
  $region15: #{gnn_forward.2} parent=0 // pred_check_branch
    %16 = sbr.rel (0) target = $region17
  $region16: #{gnn_forward.2} parent=0 // pred_region
    _
  $region17: #{gnn_forward.2} parent=0 // pred_fallthru
    _
  %p18 = scmp.eq.s32.totalorder 0, 0
  // Predicated region
  $region18: #{gnn_forward.2} parent=0 // pred_check
    %p19 = pneg %p18
  $region19: #{gnn_forward.2} parent=0 // pred_check_branch
    %21 = sbr.rel (%p19) target = $region21
  $region20: #{gnn_forward.2} parent=0 // pred_region
    %vm22 = vcmask 523264
    %23 = vst.msk [vmem:[#allocation2] sm:$0xff] %vm22, 0.0
    %24 = vst.msk [vmem:[#allocation2 + $0x8] sm:$0xff] %vm22, 0.0
    %25 = vst.msk [vmem:[#allocation2 + $0x10] sm:$0xff] %vm22, 0.0
    %26 = vst.msk [vmem:[#allocation2 + $0x18] sm:$0xff] %vm22, 0.0
    %27 = vst.msk [vmem:[#allocation2 + $0x20] sm:$0xff] %vm22, 0.0
    %28 = vst.msk [vmem:[#allocation2 + $0x28] sm:$0xff] %vm22, 0.0
    %29 = vst.msk [vmem:[#allocation2 + $0x30] sm:$0xff] %vm22, 0.0
    %30 = vst.msk [vmem:[#allocation2 + $0x38] sm:$0xff] %vm22, 0.0
    %31 = vst.msk [vmem:[#allocation2 + $0x40] sm:$0xff] %vm22, 0.0
    %32 = vst.msk [vmem:[#allocation2 + $0x48] sm:$0xff] %vm22, 0.0
    %33 = vst.msk [vmem:[#allocation2 + $0x50] sm:$0xff] %vm22, 0.0
    %34 = vst.msk [vmem:[#allocation2 + $0x58] sm:$0xff] %vm22, 0.0
    %35 = vst.msk [vmem:[#allocation2 + $0x60] sm:$0xff] %vm22, 0.0
    %36 = vst.msk [vmem:[#allocation2 + $0x68] sm:$0xff] %vm22, 0.0
    %37 = vst.msk [vmem:[#allocation2 + $0x70] sm:$0xff] %vm22, 0.0
    %38 = vst.msk [vmem:[#allocation2 + $0x78] sm:$0xff] %vm22, 0.0
    %39 = vst.msk [vmem:[#allocation2 + $0x80] sm:$0xff] %vm22, 0.0
    %40 = vst.msk [vmem:[#allocation2 + $0x88] sm:$0xff] %vm22, 0.0
    %41 = vst.msk [vmem:[#allocation2 + $0x90] sm:$0xff] %vm22, 0.0
    %42 = vst.msk [vmem:[#allocation2 + $0x98] sm:$0xff] %vm22, 0.0
    %43 = vst.msk [vmem:[#allocation2 + $0xa0] sm:$0xff] %vm22, 0.0
    %44 = vst.msk [vmem:[#allocation2 + $0xa8] sm:$0xff] %vm22, 0.0
    %45 = vst.msk [vmem:[#allocation2 + $0xb0] sm:$0xff] %vm22, 0.0
    %46 = vst.msk [vmem:[#allocation2 + $0xb8] sm:$0xff] %vm22, 0.0
    %47 = vst.msk [vmem:[#allocation2 + $0xc0] sm:$0xff] %vm22, 0.0
    %48 = vst.msk [vmem:[#allocation2 + $0xc8] sm:$0xff] %vm22, 0.0
    %49 = vst.msk [vmem:[#allocation2 + $0xd0] sm:$0xff] %vm22, 0.0
    %50 = vst.msk [vmem:[#allocation2 + $0xd8] sm:$0xff] %vm22, 0.0
    %51 = vst.msk [vmem:[#allocation2 + $0xe0] sm:$0xff] %vm22, 0.0
    %52 = vst.msk [vmem:[#allocation2 + $0xe8] sm:$0xff] %vm22, 0.0
    %53 = vst.msk [vmem:[#allocation2 + $0xf0] sm:$0xff] %vm22, 0.0
    %54 = vst.msk [vmem:[#allocation2 + $0xf8] sm:$0xff] %vm22, 0.0
  $region21: #{gnn_forward.2} parent=0 // pred_fallthru
    _
  %s55 = smul.u32 0, 256
  %s56 = sshra.s32 %s55, 3
  %s57 = sand.u32 %s55, 7
  %s58 = smul.addr %s56, 4
  %s59 = scalar_lea.vmem %s1, %s58
  %v60 = vld [vmem:[%s59] sm:$0xf]
  %v61 = vld [vmem:[%s59 + $0x4] sm:$0xf]
  %v62 = vld [vmem:[%s59 + $0x8] sm:$0xf]
  %v63 = vld [vmem:[%s59 + $0xc] sm:$0xf]
  %v64 = vld [vmem:[%s59 + $0x10] sm:$0xf]
  %v65 = vld [vmem:[%s59 + $0x14] sm:$0xf]
  %v66 = vld [vmem:[%s59 + $0x18] sm:$0xf]
  %v67 = vld [vmem:[%s59 + $0x1c] sm:$0xf]
  %v68 = vld [vmem:[%s59 + $0x20] sm:$0xf]
  %v69 = vld [vmem:[%s59 + $0x24] sm:$0xf]
  %v70 = vld [vmem:[%s59 + $0x28] sm:$0xf]
  %v71 = vld [vmem:[%s59 + $0x2c] sm:$0xf]
  %v72 = vld [vmem:[%s59 + $0x30] sm:$0xf]
  %v73 = vld [vmem:[%s59 + $0x34] sm:$0xf]
  %v74 = vld [vmem:[%s59 + $0x38] sm:$0xf]
  %v75 = vld [vmem:[%s59 + $0x3c] sm:$0xf]
  %v76 = vld [vmem:[%s59 + $0x40] sm:$0xf]
  %v77 = vld [vmem:[%s59 + $0x44] sm:$0xf]
  %v78 = vld [vmem:[%s59 + $0x48] sm:$0xf]
  %v79 = vld [vmem:[%s59 + $0x4c] sm:$0xf]
  %v80 = vld [vmem:[%s59 + $0x50] sm:$0xf]
  %v81 = vld [vmem:[%s59 + $0x54] sm:$0xf]
  %v82 = vld [vmem:[%s59 + $0x58] sm:$0xf]
  %v83 = vld [vmem:[%s59 + $0x5c] sm:$0xf]
  %v84 = vld [vmem:[%s59 + $0x60] sm:$0xf]
  %v85 = vld [vmem:[%s59 + $0x64] sm:$0xf]
  %v86 = vld [vmem:[%s59 + $0x68] sm:$0xf]
  %v87 = vld [vmem:[%s59 + $0x6c] sm:$0xf]
  %v88 = vld [vmem:[%s59 + $0x70] sm:$0xf]
  %v89 = vld [vmem:[%s59 + $0x74] sm:$0xf]
  %v90 = vld [vmem:[%s59 + $0x78] sm:$0xf]
  %v91 = vld [vmem:[%s59 + $0x7c] sm:$0xf]
  %v92 = vld [vmem:[#allocation2] sm:$0xff]
  %v93 = vld [vmem:[#allocation2 + $0x8] sm:$0xff]
  %v94 = vld [vmem:[#allocation2 + $0x10] sm:$0xff]
  %v95 = vld [vmem:[#allocation2 + $0x18] sm:$0xff]
  %v96 = vld [vmem:[#allocation2 + $0x20] sm:$0xff]
  %v97 = vld [vmem:[#allocation2 + $0x28] sm:$0xff]
  %v98 = vld [vmem:[#allocation2 + $0x30] sm:$0xff]
  %v99 = vld [vmem:[#allocation2 + $0x38] sm:$0xff]
  %v100 = vld [vmem:[#allocation2 + $0x40] sm:$0xff]
  %v101 = vld [vmem:[#allocation2 + $0x48] sm:$0xff]
  %v102 = vld [vmem:[#allocation2 + $0x50] sm:$0xff]
  %v103 = vld [vmem:[#allocation2 + $0x58] sm:$0xff]
  %v104 = vld [vmem:[#allocation2 + $0x60] sm:$0xff]
  %v105 = vld [vmem:[#allocation2 + $0x68] sm:$0xff]
  %v106 = vld [vmem:[#allocation2 + $0x70] sm:$0xff]
  %v107 = vld [vmem:[#allocation2 + $0x78] sm:$0xff]
  %v108 = vld [vmem:[#allocation2 + $0x80] sm:$0xff]
  %v109 = vld [vmem:[#allocation2 + $0x88] sm:$0xff]
  %v110 = vld [vmem:[#allocation2 + $0x90] sm:$0xff]
  %v111 = vld [vmem:[#allocation2 + $0x98] sm:$0xff]
  %v112 = vld [vmem:[#allocation2 + $0xa0] sm:$0xff]
  %v113 = vld [vmem:[#allocation2 + $0xa8] sm:$0xff]
  %v114 = vld [vmem:[#allocation2 + $0xb0] sm:$0xff]
  %v115 = vld [vmem:[#allocation2 + $0xb8] sm:$0xff]
  %v116 = vld [vmem:[#allocation2 + $0xc0] sm:$0xff]
  %v117 = vld [vmem:[#allocation2 + $0xc8] sm:$0xff]
  %v118 = vld [vmem:[#allocation2 + $0xd0] sm:$0xff]
  %v119 = vld [vmem:[#allocation2 + $0xd8] sm:$0xff]
  %v120 = vld [vmem:[#allocation2 + $0xe0] sm:$0xff]
  %v121 = vld [vmem:[#allocation2 + $0xe8] sm:$0xff]
  %v122 = vld [vmem:[#allocation2 + $0xf0] sm:$0xff]
  %v123 = vld [vmem:[#allocation2 + $0xf8] sm:$0xff]
  %v124 = vld [vmem:[%s0] sm:$0xff]
  %v125 = vld [vmem:[%s0 + $0x8] sm:$0xff]
  %v126 = vld [vmem:[%s0 + $0x10] sm:$0xff]
  %v127 = vld [vmem:[%s0 + $0x18] sm:$0xff]
  %v128 = vld [vmem:[%s0 + $0x20] sm:$0xff]
  %v129 = vld [vmem:[%s0 + $0x28] sm:$0xff]
  %v130 = vld [vmem:[%s0 + $0x30] sm:$0xff]
  %v131 = vld [vmem:[%s0 + $0x38] sm:$0xff]
  %v132 = vld [vmem:[%s0 + $0x40] sm:$0xff]
  %v133 = vld [vmem:[%s0 + $0x48] sm:$0xff]
  %v134 = vld [vmem:[%s0 + $0x50] sm:$0xff]
  %v135 = vld [vmem:[%s0 + $0x58] sm:$0xff]
  %v136 = vld [vmem:[%s0 + $0x60] sm:$0xff]
  %v137 = vld [vmem:[%s0 + $0x68] sm:$0xff]
  %v138 = vld [vmem:[%s0 + $0x70] sm:$0xff]
  %v139 = vld [vmem:[%s0 + $0x78] sm:$0xff]
  %v140 = vld [vmem:[%s0 + $0x80] sm:$0xff]
  %v141 = vld [vmem:[%s0 + $0x88] sm:$0xff]
  %v142 = vld [vmem:[%s0 + $0x90] sm:$0xff]
  %v143 = vld [vmem:[%s0 + $0x98] sm:$0xff]
  %v144 = vld [vmem:[%s0 + $0xa0] sm:$0xff]
  %v145 = vld [vmem:[%s0 + $0xa8] sm:$0xff]
  %v146 = vld [vmem:[%s0 + $0xb0] sm:$0xff]
  %v147 = vld [vmem:[%s0 + $0xb8] sm:$0xff]
  %v148 = vld [vmem:[%s0 + $0xc0] sm:$0xff]
  %v149 = vld [vmem:[%s0 + $0xc8] sm:$0xff]
  %v150 = vld [vmem:[%s0 + $0xd0] sm:$0xff]
  %v151 = vld [vmem:[%s0 + $0xd8] sm:$0xff]
  %v152 = vld [vmem:[%s0 + $0xe0] sm:$0xff]
  %v153 = vld [vmem:[%s0 + $0xe8] sm:$0xff]
  %v154 = vld [vmem:[%s0 + $0xf0] sm:$0xff]
  %v155 = vld [vmem:[%s0 + $0xf8] sm:$0xff]
  %v188 = vunpack.c.l.b16 %v124
  %v189 = vunpack.c.h.b16 %v124
  %v190 = vunpack.c.l.b16 %v125
  %v191 = vunpack.c.h.b16 %v125
  %v192 = vunpack.c.l.b16 %v126
  %v193 = vunpack.c.h.b16 %v126
  %v194 = vunpack.c.l.b16 %v127
  %v195 = vunpack.c.h.b16 %v127
  %v196 = vunpack.c.l.b16 %v128
  %v197 = vunpack.c.h.b16 %v128
  %v198 = vunpack.c.l.b16 %v129
  %v199 = vunpack.c.h.b16 %v129
  %v200 = vunpack.c.l.b16 %v130
  %v201 = vunpack.c.h.b16 %v130
  %v202 = vunpack.c.l.b16 %v131
  %v203 = vunpack.c.h.b16 %v131
  %v204 = vunpack.c.l.b16 %v132
  %v205 = vunpack.c.h.b16 %v132
  %v206 = vunpack.c.l.b16 %v133
  %v207 = vunpack.c.h.b16 %v133
  %v208 = vunpack.c.l.b16 %v134
  %v209 = vunpack.c.h.b16 %v134
  %v210 = vunpack.c.l.b16 %v135
  %v211 = vunpack.c.h.b16 %v135
  %v212 = vunpack.c.l.b16 %v136
  %v213 = vunpack.c.h.b16 %v136
  %v214 = vunpack.c.l.b16 %v137
  %v215 = vunpack.c.h.b16 %v137
  %v216 = vunpack.c.l.b16 %v138
  %v217 = vunpack.c.h.b16 %v138
  %v218 = vunpack.c.l.b16 %v139
  %v219 = vunpack.c.h.b16 %v139
  %v220 = vunpack.c.l.b16 %v140
  %v221 = vunpack.c.h.b16 %v140
  %v222 = vunpack.c.l.b16 %v141
  %v223 = vunpack.c.h.b16 %v141
  %v224 = vunpack.c.l.b16 %v142
  %v225 = vunpack.c.h.b16 %v142
  %v226 = vunpack.c.l.b16 %v143
  %v227 = vunpack.c.h.b16 %v143
  %v228 = vunpack.c.l.b16 %v144
  %v229 = vunpack.c.h.b16 %v144
  %v230 = vunpack.c.l.b16 %v145
  %v231 = vunpack.c.h.b16 %v145
  %v232 = vunpack.c.l.b16 %v146
  %v233 = vunpack.c.h.b16 %v146
  %v234 = vunpack.c.l.b16 %v147
  %v235 = vunpack.c.h.b16 %v147
  %v236 = vunpack.c.l.b16 %v148
  %v237 = vunpack.c.h.b16 %v148
  %v238 = vunpack.c.l.b16 %v149
  %v239 = vunpack.c.h.b16 %v149
  %v240 = vunpack.c.l.b16 %v150
  %v241 = vunpack.c.h.b16 %v150
  %v242 = vunpack.c.l.b16 %v151
  %v243 = vunpack.c.h.b16 %v151
  %v244 = vunpack.c.l.b16 %v152
  %v245 = vunpack.c.h.b16 %v152
  %v246 = vunpack.c.l.b16 %v153
  %v247 = vunpack.c.h.b16 %v153
  %v248 = vunpack.c.l.b16 %v154
  %v249 = vunpack.c.h.b16 %v154
  %v250 = vunpack.c.l.b16 %v155
  %v251 = vunpack.c.h.b16 %v155
  %v252 = vpack.c.b16 %v190, %v188
  %v253 = vpack.c.b16 %v191, %v189
  %v254 = vpack.c.b16 %v194, %v192
  %v255 = vpack.c.b16 %v195, %v193
  %v256 = vpack.c.b16 %v198, %v196
  %v257 = vpack.c.b16 %v199, %v197
  %v258 = vpack.c.b16 %v202, %v200
  %v259 = vpack.c.b16 %v203, %v201
  %v260 = vpack.c.b16 %v206, %v204
  %v261 = vpack.c.b16 %v207, %v205
  %v262 = vpack.c.b16 %v210, %v208
  %v263 = vpack.c.b16 %v211, %v209
  %v264 = vpack.c.b16 %v214, %v212
  %v265 = vpack.c.b16 %v215, %v213
  %v266 = vpack.c.b16 %v218, %v216
  %v267 = vpack.c.b16 %v219, %v217
  %v268 = vpack.c.b16 %v222, %v220
  %v269 = vpack.c.b16 %v223, %v221
  %v270 = vpack.c.b16 %v226, %v224
  %v271 = vpack.c.b16 %v227, %v225
  %v272 = vpack.c.b16 %v230, %v228
  %v273 = vpack.c.b16 %v231, %v229
  %v274 = vpack.c.b16 %v234, %v232
  %v275 = vpack.c.b16 %v235, %v233
  %v276 = vpack.c.b16 %v238, %v236
  %v277 = vpack.c.b16 %v239, %v237
  %v278 = vpack.c.b16 %v242, %v240
  %v279 = vpack.c.b16 %v243, %v241
  %v280 = vpack.c.b16 %v246, %v244
  %v281 = vpack.c.b16 %v247, %v245
  %v282 = vpack.c.b16 %v250, %v248
  %v283 = vpack.c.b16 %v251, %v249
  %v348 = vunpack.c.l.b16 %v60
  %v349 = vunpack.c.l.b16 %v61
  %v350 = vunpack.c.l.b16 %v62
  %v351 = vunpack.c.l.b16 %v63
  %v352 = vunpack.c.l.b16 %v64
  %v353 = vunpack.c.l.b16 %v65
  %v354 = vunpack.c.l.b16 %v66
  %v355 = vunpack.c.l.b16 %v67
  %v356 = vunpack.c.l.b16 %v68
  %v357 = vunpack.c.l.b16 %v69
  %v358 = vunpack.c.l.b16 %v70
  %v359 = vunpack.c.l.b16 %v71
  %v360 = vunpack.c.l.b16 %v72
  %v361 = vunpack.c.l.b16 %v73
  %v362 = vunpack.c.l.b16 %v74
  %v363 = vunpack.c.l.b16 %v75
  %v364 = vunpack.c.l.b16 %v76
  %v365 = vunpack.c.l.b16 %v77
  %v366 = vunpack.c.l.b16 %v78
  %v367 = vunpack.c.l.b16 %v79
  %v368 = vunpack.c.l.b16 %v80
  %v369 = vunpack.c.l.b16 %v81
  %v370 = vunpack.c.l.b16 %v82
  %v371 = vunpack.c.l.b16 %v83
  %v372 = vunpack.c.l.b16 %v84
  %v373 = vunpack.c.l.b16 %v85
  %v374 = vunpack.c.l.b16 %v86
  %v375 = vunpack.c.l.b16 %v87
  %v376 = vunpack.c.l.b16 %v88
  %v377 = vunpack.c.l.b16 %v89
  %v378 = vunpack.c.l.b16 %v90
  %v379 = vunpack.c.l.b16 %v91
  %v380 = vpack.c.b16 %v349, %v348
  %v381 = vpack.c.b16 %v351, %v350
  %v382 = vpack.c.b16 %v353, %v352
  %v383 = vpack.c.b16 %v355, %v354
  %v384 = vpack.c.b16 %v357, %v356
  %v385 = vpack.c.b16 %v359, %v358
  %v386 = vpack.c.b16 %v361, %v360
  %v387 = vpack.c.b16 %v363, %v362
  %v388 = vpack.c.b16 %v365, %v364
  %v389 = vpack.c.b16 %v367, %v366
  %v390 = vpack.c.b16 %v369, %v368
  %v391 = vpack.c.b16 %v371, %v370
  %v392 = vpack.c.b16 %v373, %v372
  %v393 = vpack.c.b16 %v375, %v374
  %v394 = vpack.c.b16 %v377, %v376
  %v395 = vpack.c.b16 %v379, %v378
  %412 = vmatprep.subr.bf16.mxu0 0
  %413 = vmatpush1.bf16.msra.mxu0 %v387
  %414 = vmatprep.subr.bf16.mxu0 0
  %415 = vmatpush1.bf16.msra.mxu0 %v386
  %416 = vmatprep.subr.bf16.mxu0 0
  %417 = vmatpush1.bf16.msra.mxu0 %v385
  %418 = vmatprep.subr.bf16.mxu0 0
  %419 = vmatpush1.bf16.msra.mxu0 %v384
  %420 = vmatprep.subr.bf16.mxu0 0
  %421 = vmatpush1.bf16.msra.mxu0 %v383
  %422 = vmatprep.subr.bf16.mxu0 0
  %423 = vmatpush1.bf16.msra.mxu0 %v382
  %424 = vmatprep.subr.bf16.mxu0 0
  %425 = vmatpush1.bf16.msra.mxu0 %v381
  %426 = vmatprep.subr.bf16.mxu0 0
  %427 = vmatpush1.bf16.msra.mxu0 %v380
  %428 = vmatprep.subr.bf16.mxu0 0
  %429 = vmatpush2.bf16.msra.mxu0 %v395
  %430 = vmatprep.subr.bf16.mxu0 0
  %431 = vmatpush2.bf16.msra.mxu0 %v394
  %432 = vmatprep.subr.bf16.mxu0 0
  %433 = vmatpush2.bf16.msra.mxu0 %v393
  %434 = vmatprep.subr.bf16.mxu0 0
  %435 = vmatpush2.bf16.msra.mxu0 %v392
  %436 = vmatprep.subr.bf16.mxu0 0
  %437 = vmatpush2.bf16.msra.mxu0 %v391
  %438 = vmatprep.subr.bf16.mxu0 0
  %439 = vmatpush2.bf16.msra.mxu0 %v390
  %440 = vmatprep.subr.bf16.mxu0 0
  %441 = vmatpush2.bf16.msra.mxu0 %v389
  %442 = vmatprep.subr.bf16.mxu0 0
  %443 = vmatpush2.bf16.msra.mxu0 %v388
  %444 = vmatprep.mubr.bf16.mxu0 %v253
  %445 = vmatmul.mubr.bf16.gmra.mxu0 %v252
  %v446 = vpop.f32.mrf.mxu0
  %v447 = vadd.f32 0.0, %v446
  %v448 = vpop.f32.mrf.mxu0
  %v449 = vpop.f32.mrf.mxu0
  %v450 = vadd.f32 0.0, %v449
  %v451 = vpop.f32.mrf.mxu0
  %452 = vmatprep.mubr.bf16.mxu0 %v255
  %453 = vmatmul.mubr.bf16.gmra.mxu0 %v254
  %v454 = vpop.f32.mrf.mxu0
  %v455 = vadd.f32 0.0, %v454
  %v456 = vpop.f32.mrf.mxu0
  %v457 = vpop.f32.mrf.mxu0
  %v458 = vadd.f32 0.0, %v457
  %v459 = vpop.f32.mrf.mxu0
  %460 = vmatprep.mubr.bf16.mxu0 %v257
  %461 = vmatmul.mubr.bf16.gmra.mxu0 %v256
  %v462 = vpop.f32.mrf.mxu0
  %v463 = vadd.f32 0.0, %v462
  %v464 = vpop.f32.mrf.mxu0
  %v465 = vpop.f32.mrf.mxu0
  %v466 = vadd.f32 0.0, %v465
  %v467 = vpop.f32.mrf.mxu0
  %468 = vmatprep.mubr.bf16.mxu0 %v259
  %469 = vmatmul.mubr.bf16.gmra.mxu0 %v258
  %v470 = vpop.f32.mrf.mxu0
  %v471 = vadd.f32 0.0, %v470
  %v472 = vpop.f32.mrf.mxu0
  %v473 = vpop.f32.mrf.mxu0
  %v474 = vadd.f32 0.0, %v473
  %v475 = vpop.f32.mrf.mxu0
  %476 = vmatprep.mubr.bf16.mxu0 %v261
  %477 = vmatmul.mubr.bf16.gmra.mxu0 %v260
  %v478 = vpop.f32.mrf.mxu0
  %v479 = vadd.f32 0.0, %v478
  %v480 = vpop.f32.mrf.mxu0
  %v481 = vpop.f32.mrf.mxu0
  %v482 = vadd.f32 0.0, %v481
  %v483 = vpop.f32.mrf.mxu0
  %484 = vmatprep.mubr.bf16.mxu0 %v263
  %485 = vmatmul.mubr.bf16.gmra.mxu0 %v262
  %v486 = vpop.f32.mrf.mxu0
  %v487 = vadd.f32 0.0, %v486
  %v488 = vpop.f32.mrf.mxu0
  %v489 = vpop.f32.mrf.mxu0
  %v490 = vadd.f32 0.0, %v489
  %v491 = vpop.f32.mrf.mxu0
  %492 = vmatprep.mubr.bf16.mxu0 %v265
  %493 = vmatmul.mubr.bf16.gmra.mxu0 %v264
  %v494 = vpop.f32.mrf.mxu0
  %v495 = vadd.f32 0.0, %v494
  %v496 = vpop.f32.mrf.mxu0
  %v497 = vpop.f32.mrf.mxu0
  %v498 = vadd.f32 0.0, %v497
  %v499 = vpop.f32.mrf.mxu0
  %500 = vmatprep.mubr.bf16.mxu0 %v267
  %501 = vmatmul.mubr.bf16.gmra.mxu0 %v266
  %v502 = vpop.f32.mrf.mxu0
  %v503 = vadd.f32 0.0, %v502
  %v504 = vpop.f32.mrf.mxu0
  %v505 = vpop.f32.mrf.mxu0
  %v506 = vadd.f32 0.0, %v505
  %v507 = vpop.f32.mrf.mxu0
  %508 = vmatprep.mubr.bf16.mxu0 %v269
  %509 = vmatmul.mubr.bf16.gmra.mxu0 %v268
  %v510 = vpop.f32.mrf.mxu0
  %v511 = vadd.f32 0.0, %v510
  %v512 = vpop.f32.mrf.mxu0
  %v513 = vpop.f32.mrf.mxu0
  %v514 = vadd.f32 0.0, %v513
  %v515 = vpop.f32.mrf.mxu0
  %516 = vmatprep.mubr.bf16.mxu0 %v271
  %517 = vmatmul.mubr.bf16.gmra.mxu0 %v270
  %v518 = vpop.f32.mrf.mxu0
  %v519 = vadd.f32 0.0, %v518
  %v520 = vpop.f32.mrf.mxu0
  %v521 = vpop.f32.mrf.mxu0
  %v522 = vadd.f32 0.0, %v521
  %v523 = vpop.f32.mrf.mxu0
  %524 = vmatprep.mubr.bf16.mxu0 %v273
  %525 = vmatmul.mubr.bf16.gmra.mxu0 %v272
  %v526 = vpop.f32.mrf.mxu0
  %v527 = vadd.f32 0.0, %v526
  %v528 = vpop.f32.mrf.mxu0
  %v529 = vpop.f32.mrf.mxu0
  %v530 = vadd.f32 0.0, %v529
  %v531 = vpop.f32.mrf.mxu0
  %532 = vmatprep.mubr.bf16.mxu0 %v275
  %533 = vmatmul.mubr.bf16.gmra.mxu0 %v274
  %v534 = vpop.f32.mrf.mxu0
  %v535 = vadd.f32 0.0, %v534
  %v536 = vpop.f32.mrf.mxu0
  %v537 = vpop.f32.mrf.mxu0
  %v538 = vadd.f32 0.0, %v537
  %v539 = vpop.f32.mrf.mxu0
  %540 = vmatprep.mubr.bf16.mxu0 %v277
  %541 = vmatmul.mubr.bf16.gmra.mxu0 %v276
  %v542 = vpop.f32.mrf.mxu0
  %v543 = vadd.f32 0.0, %v542
  %v544 = vpop.f32.mrf.mxu0
  %v545 = vpop.f32.mrf.mxu0
  %v546 = vadd.f32 0.0, %v545
  %v547 = vpop.f32.mrf.mxu0
  %548 = vmatprep.mubr.bf16.mxu0 %v279
  %549 = vmatmul.mubr.bf16.gmra.mxu0 %v278
  %v550 = vpop.f32.mrf.mxu0
  %v551 = vadd.f32 0.0, %v550
  %v552 = vpop.f32.mrf.mxu0
  %v553 = vpop.f32.mrf.mxu0
  %v554 = vadd.f32 0.0, %v553
  %v555 = vpop.f32.mrf.mxu0
  %556 = vmatprep.mubr.bf16.mxu0 %v281
  %557 = vmatmul.mubr.bf16.gmra.mxu0 %v280
  %v558 = vpop.f32.mrf.mxu0
  %v559 = vadd.f32 0.0, %v558
  %v560 = vpop.f32.mrf.mxu0
  %v561 = vpop.f32.mrf.mxu0
  %v562 = vadd.f32 0.0, %v561
  %v563 = vpop.f32.mrf.mxu0
  %564 = vmatprep.mubr.bf16.mxu0 %v283
  %565 = vmatmul.mubr.bf16.gmra.mxu0 %v282
  %v566 = vpop.f32.mrf.mxu0
  %v567 = vadd.f32 0.0, %v566
  %v568 = vpop.f32.mrf.mxu0
  %v569 = vpop.f32.mrf.mxu0
  %v570 = vadd.f32 0.0, %v569
  %v571 = vpop.f32.mrf.mxu0
  %572 = vdwg.mxu0
  %v573 = vadd.f32 %v92, %v447
  %v574 = vadd.f32 %v93, %v450
  %v575 = vadd.f32 %v94, %v455
  %v576 = vadd.f32 %v95, %v458
  %v577 = vadd.f32 %v96, %v463
  %v578 = vadd.f32 %v97, %v466
  %v579 = vadd.f32 %v98, %v471
  %v580 = vadd.f32 %v99, %v474
  %v581 = vadd.f32 %v100, %v479
  %v582 = vadd.f32 %v101, %v482
  %v583 = vadd.f32 %v102, %v487
  %v584 = vadd.f32 %v103, %v490
  %v585 = vadd.f32 %v104, %v495
  %v586 = vadd.f32 %v105, %v498
  %v587 = vadd.f32 %v106, %v503
  %v588 = vadd.f32 %v107, %v506
  %v589 = vadd.f32 %v108, %v511
  %v590 = vadd.f32 %v109, %v514
  %v591 = vadd.f32 %v110, %v519
  %v592 = vadd.f32 %v111, %v522
  %v593 = vadd.f32 %v112, %v527
  %v594 = vadd.f32 %v113, %v530
  %v595 = vadd.f32 %v114, %v535
  %v596 = vadd.f32 %v115, %v538
  %v597 = vadd.f32 %v116, %v543
  %v598 = vadd.f32 %v117, %v546
  %v599 = vadd.f32 %v118, %v551
  %v600 = vadd.f32 %v119, %v554
  %v601 = vadd.f32 %v120, %v559
  %v602 = vadd.f32 %v121, %v562
  %v603 = vadd.f32 %v122, %v567
  %v604 = vadd.f32 %v123, %v570
  %vm605 = vcmask 523264
  %606 = vst.msk [vmem:[#allocation2] sm:$0xff] %vm605, %v573
  %607 = vst.msk [vmem:[#allocation2 + $0x8] sm:$0xff] %vm605, %v574
  %608 = vst.msk [vmem:[#allocation2 + $0x10] sm:$0xff] %vm605, %v575
  %609 = vst.msk [vmem:[#allocation2 + $0x18] sm:$0xff] %vm605, %v576
  %610 = vst.msk [vmem:[#allocation2 + $0x20] sm:$0xff] %vm605, %v577
  %611 = vst.msk [vmem:[#allocation2 + $0x28] sm:$0xff] %vm605, %v578
  %612 = vst.msk [vmem:[#allocation2 + $0x30] sm:$0xff] %vm605, %v579
  %613 = vst.msk [vmem:[#allocation2 + $0x38] sm:$0xff] %vm605, %v580
  %614 = vst.msk [vmem:[#allocation2 + $0x40] sm:$0xff] %vm605, %v581
  %615 = vst.msk [vmem:[#allocation2 + $0x48] sm:$0xff] %vm605, %v582
  %616 = vst.msk [vmem:[#allocation2 + $0x50] sm:$0xff] %vm605, %v583
  %617 = vst.msk [vmem:[#allocation2 + $0x58] sm:$0xff] %vm605, %v584
  %618 = vst.msk [vmem:[#allocation2 + $0x60] sm:$0xff] %vm605, %v585
  %619 = vst.msk [vmem:[#allocation2 + $0x68] sm:$0xff] %vm605, %v586
  %620 = vst.msk [vmem:[#allocation2 + $0x70] sm:$0xff] %vm605, %v587
  %621 = vst.msk [vmem:[#allocation2 + $0x78] sm:$0xff] %vm605, %v588
  %622 = vst.msk [vmem:[#allocation2 + $0x80] sm:$0xff] %vm605, %v589
  %623 = vst.msk [vmem:[#allocation2 + $0x88] sm:$0xff] %vm605, %v590
  %624 = vst.msk [vmem:[#allocation2 + $0x90] sm:$0xff] %vm605, %v591
  %625 = vst.msk [vmem:[#allocation2 + $0x98] sm:$0xff] %vm605, %v592
  %626 = vst.msk [vmem:[#allocation2 + $0xa0] sm:$0xff] %vm605, %v593
  %627 = vst.msk [vmem:[#allocation2 + $0xa8] sm:$0xff] %vm605, %v594
  %628 = vst.msk [vmem:[#allocation2 + $0xb0] sm:$0xff] %vm605, %v595
  %629 = vst.msk [vmem:[#allocation2 + $0xb8] sm:$0xff] %vm605, %v596
  %630 = vst.msk [vmem:[#allocation2 + $0xc0] sm:$0xff] %vm605, %v597
  %631 = vst.msk [vmem:[#allocation2 + $0xc8] sm:$0xff] %vm605, %v598
  %632 = vst.msk [vmem:[#allocation2 + $0xd0] sm:$0xff] %vm605, %v599
  %633 = vst.msk [vmem:[#allocation2 + $0xd8] sm:$0xff] %vm605, %v600
  %634 = vst.msk [vmem:[#allocation2 + $0xe0] sm:$0xff] %vm605, %v601
  %635 = vst.msk [vmem:[#allocation2 + $0xe8] sm:$0xff] %vm605, %v602
  %636 = vst.msk [vmem:[#allocation2 + $0xf0] sm:$0xff] %vm605, %v603
  %637 = vst.msk [vmem:[#allocation2 + $0xf8] sm:$0xff] %vm605, %v604
  // Predicated region
  $region22: #{gnn_forward.2} parent=0 // pred_check
    %p638 = pneg %p18
  $region23: #{gnn_forward.2} parent=0 // pred_check_branch
    %640 = sbr.rel (%p638) target = $region25
  $region24: #{gnn_forward.2} parent=0 // pred_region
    %v641 = vld [vmem:[#allocation2] sm:$0xff]
    %v642 = vld [vmem:[#allocation2 + $0x8] sm:$0xff]
    %v643 = vld [vmem:[#allocation2 + $0x10] sm:$0xff]
    %v644 = vld [vmem:[#allocation2 + $0x18] sm:$0xff]
    %v645 = vld [vmem:[#allocation2 + $0x20] sm:$0xff]
    %v646 = vld [vmem:[#allocation2 + $0x28] sm:$0xff]
    %v647 = vld [vmem:[#allocation2 + $0x30] sm:$0xff]
    %v648 = vld [vmem:[#allocation2 + $0x38] sm:$0xff]
    %v649 = vld [vmem:[#allocation2 + $0x40] sm:$0xff]
    %v650 = vld [vmem:[#allocation2 + $0x48] sm:$0xff]
    %v651 = vld [vmem:[#allocation2 + $0x50] sm:$0xff]
    %v652 = vld [vmem:[#allocation2 + $0x58] sm:$0xff]
    %v653 = vld [vmem:[#allocation2 + $0x60] sm:$0xff]
    %v654 = vld [vmem:[#allocation2 + $0x68] sm:$0xff]
    %v655 = vld [vmem:[#allocation2 + $0x70] sm:$0xff]
    %v656 = vld [vmem:[#allocation2 + $0x78] sm:$0xff]
    %v657 = vld [vmem:[#allocation2 + $0x80] sm:$0xff]
    %v658 = vld [vmem:[#allocation2 + $0x88] sm:$0xff]
    %v659 = vld [vmem:[#allocation2 + $0x90] sm:$0xff]
    %v660 = vld [vmem:[#allocation2 + $0x98] sm:$0xff]
    %v661 = vld [vmem:[#allocation2 + $0xa0] sm:$0xff]
    %v662 = vld [vmem:[#allocation2 + $0xa8] sm:$0xff]
    %v663 = vld [vmem:[#allocation2 + $0xb0] sm:$0xff]
    %v664 = vld [vmem:[#allocation2 + $0xb8] sm:$0xff]
    %v665 = vld [vmem:[#allocation2 + $0xc0] sm:$0xff]
    %v666 = vld [vmem:[#allocation2 + $0xc8] sm:$0xff]
    %v667 = vld [vmem:[#allocation2 + $0xd0] sm:$0xff]
    %v668 = vld [vmem:[#allocation2 + $0xd8] sm:$0xff]
    %v669 = vld [vmem:[#allocation2 + $0xe0] sm:$0xff]
    %v670 = vld [vmem:[#allocation2 + $0xe8] sm:$0xff]
    %v671 = vld [vmem:[#allocation2 + $0xf0] sm:$0xff]
    %v672 = vld [vmem:[#allocation2 + $0xf8] sm:$0xff]
    %v673 = vld [vmem:[%s2] sm:$0xff]
    %v674 = vld [vmem:[%s2 + $0x8] sm:$0xff]
    %v675 = vld [vmem:[%s2 + $0x10] sm:$0xff]
    %v676 = vld [vmem:[%s2 + $0x18] sm:$0xff]
    %v677 = vld [vmem:[%s2 + $0x20] sm:$0xff]
    %v678 = vld [vmem:[%s2 + $0x28] sm:$0xff]
    %v679 = vld [vmem:[%s2 + $0x30] sm:$0xff]
    %v680 = vld [vmem:[%s2 + $0x38] sm:$0xff]
    %v681 = vld [vmem:[%s3] sm:$0x1]
    %v683 = vlaneseq
    %v684 = vshrl.u32 %v683, 7
    %v685 = vsub.s32 0, %v684
    %v686 = vrot.slane %v681, %v685
    %v689 = vsel %vm605, %v641, 0
    %v692 = vsel %vm605, %v642, 0
    %v695 = vsel %vm605, %v643, 0
    %v698 = vsel %vm605, %v644, 0
    %v701 = vsel %vm605, %v645, 0
    %v704 = vsel %vm605, %v646, 0
    %v707 = vsel %vm605, %v647, 0
    %v710 = vsel %vm605, %v648, 0
    %v713 = vsel %vm605, %v649, 0
    %v716 = vsel %vm605, %v650, 0
    %v719 = vsel %vm605, %v651, 0
    %v722 = vsel %vm605, %v652, 0
    %v725 = vsel %vm605, %v653, 0
    %v728 = vsel %vm605, %v654, 0
    %v731 = vsel %vm605, %v655, 0
    %v734 = vsel %vm605, %v656, 0
    %v737 = vsel %vm605, %v657, 0
    %v740 = vsel %vm605, %v658, 0
    %v743 = vsel %vm605, %v659, 0
    %v746 = vsel %vm605, %v660, 0
    %v749 = vsel %vm605, %v661, 0
    %v752 = vsel %vm605, %v662, 0
    %v755 = vsel %vm605, %v663, 0
    %v758 = vsel %vm605, %v664, 0
    %v761 = vsel %vm605, %v665, 0
    %v764 = vsel %vm605, %v666, 0
    %v767 = vsel %vm605, %v667, 0
    %v770 = vsel %vm605, %v668, 0
    %v773 = vsel %vm605, %v669, 0
    %v776 = vsel %vm605, %v670, 0
    %v779 = vsel %vm605, %v671, 0
    %v782 = vsel %vm605, %v672, 0
    %784 = vmatprep.subr.mxu0 0.0
    %785 = vmatpush1.msra.mxu0 0.0
    %786 = vmatprep.subr.mxu0 0.0
    %787 = vmatpush1.msra.mxu0 0.0
    %788 = vmatprep.subr.mxu0 0.0
    %789 = vmatpush1.msra.mxu0 0.0
    %790 = vmatprep.subr.mxu0 0.0
    %791 = vmatpush1.msra.mxu0 0.0
    %792 = vmatprep.subr.mxu0 0.0
    %793 = vmatpush1.msra.mxu0 0.0
    %794 = vmatprep.subr.mxu0 0.0
    %795 = vmatpush1.msra.mxu0 0.0
    %796 = vmatprep.subr.mxu0 0.0
    %797 = vmatpush1.msra.mxu0 0.0
    %798 = vmatprep.subr.mxu0 0.0
    %799 = vmatpush1.msra.mxu0 0.0
    %800 = vmatprep.subr.mxu0 0.0
    %801 = vmatpush1.msra.mxu0 %v680
    %802 = vmatprep.subr.mxu0 0.0
    %803 = vmatpush1.msra.mxu0 %v679
    %804 = vmatprep.subr.mxu0 0.0
    %805 = vmatpush1.msra.mxu0 %v678
    %806 = vmatprep.subr.mxu0 0.0
    %807 = vmatpush1.msra.mxu0 %v677
    %808 = vmatprep.subr.mxu0 0.0
    %809 = vmatpush1.msra.mxu0 %v676
    %810 = vmatprep.subr.mxu0 0.0
    %811 = vmatpush1.msra.mxu0 %v675
    %812 = vmatprep.subr.mxu0 0.0
    %813 = vmatpush1.msra.mxu0 %v674
    %814 = vmatprep.subr.mxu0 0.0
    %815 = vmatpush1.msra.mxu0 %v673
    %816 = vmatprep.subr.mxu0 0.0
    %817 = vmatpush2.msra.mxu0 0.0
    %818 = vmatprep.subr.mxu0 0.0
    %819 = vmatpush2.msra.mxu0 0.0
    %820 = vmatprep.subr.mxu0 0.0
    %821 = vmatpush2.msra.mxu0 0.0
    %822 = vmatprep.subr.mxu0 0.0
    %823 = vmatpush2.msra.mxu0 0.0
    %824 = vmatprep.subr.mxu0 0.0
    %825 = vmatpush2.msra.mxu0 0.0
    %826 = vmatprep.subr.mxu0 0.0
    %827 = vmatpush2.msra.mxu0 0.0
    %828 = vmatprep.subr.mxu0 0.0
    %829 = vmatpush2.msra.mxu0 0.0
    %830 = vmatprep.subr.mxu0 0.0
    %831 = vmatpush2.msra.mxu0 0.0
    %832 = vmatprep.subr.mxu0 0.0
    %833 = vmatpush2.msra.mxu0 0.0
    %834 = vmatprep.subr.mxu0 0.0
    %835 = vmatpush2.msra.mxu0 0.0
    %836 = vmatprep.subr.mxu0 0.0
    %837 = vmatpush2.msra.mxu0 0.0
    %838 = vmatprep.subr.mxu0 0.0
    %839 = vmatpush2.msra.mxu0 0.0
    %840 = vmatprep.subr.mxu0 0.0
    %841 = vmatpush2.msra.mxu0 0.0
    %842 = vmatprep.subr.mxu0 0.0
    %843 = vmatpush2.msra.mxu0 0.0
    %844 = vmatprep.subr.mxu0 0.0
    %845 = vmatpush2.msra.mxu0 0.0
    %846 = vmatprep.subr.mxu0 0.0
    %847 = vmatpush2.msra.mxu0 0.0
    %848 = vmatprep.mubr.f32.mxu0 0.0
    %849 = vmatmul.mubr.f32.gmra.mxu0 %v689
    %v850 = vpop.f32.mrf.mxu0
    %v851 = vadd.f32 %v686, %v850
    %v852 = vpop.f32.mrf.mxu0
    %853 = vmatprep.mubr.f32.mxu0 0.0
    %854 = vmatmul.mubr.f32.gmra.mxu0 %v692
    %v855 = vpop.f32.mrf.mxu0
    %v856 = vadd.f32 %v686, %v855
    %v857 = vpop.f32.mrf.mxu0
    %858 = vmatprep.mubr.f32.mxu0 0.0
    %859 = vmatmul.mubr.f32.gmra.mxu0 %v695
    %v860 = vpop.f32.mrf.mxu0
    %v861 = vadd.f32 %v686, %v860
    %v862 = vpop.f32.mrf.mxu0
    %863 = vmatprep.mubr.f32.mxu0 0.0
    %864 = vmatmul.mubr.f32.gmra.mxu0 %v698
    %v865 = vpop.f32.mrf.mxu0
    %v866 = vadd.f32 %v686, %v865
    %v867 = vpop.f32.mrf.mxu0
    %868 = vmatprep.mubr.f32.mxu0 0.0
    %869 = vmatmul.mubr.f32.gmra.mxu0 %v701
    %v870 = vpop.f32.mrf.mxu0
    %v871 = vadd.f32 %v686, %v870
    %v872 = vpop.f32.mrf.mxu0
    %873 = vmatprep.mubr.f32.mxu0 0.0
    %874 = vmatmul.mubr.f32.gmra.mxu0 %v704
    %v875 = vpop.f32.mrf.mxu0
    %v876 = vadd.f32 %v686, %v875
    %v877 = vpop.f32.mrf.mxu0
    %878 = vmatprep.mubr.f32.mxu0 0.0
    %879 = vmatmul.mubr.f32.gmra.mxu0 %v707
    %v880 = vpop.f32.mrf.mxu0
    %v881 = vadd.f32 %v686, %v880
    %v882 = vpop.f32.mrf.mxu0
    %883 = vmatprep.mubr.f32.mxu0 0.0
    %884 = vmatmul.mubr.f32.gmra.mxu0 %v710
    %v885 = vpop.f32.mrf.mxu0
    %v886 = vadd.f32 %v686, %v885
    %v887 = vpop.f32.mrf.mxu0
    %888 = vmatprep.mubr.f32.mxu0 0.0
    %889 = vmatmul.mubr.f32.gmra.mxu0 %v713
    %v890 = vpop.f32.mrf.mxu0
    %v891 = vadd.f32 %v686, %v890
    %v892 = vpop.f32.mrf.mxu0
    %893 = vmatprep.mubr.f32.mxu0 0.0
    %894 = vmatmul.mubr.f32.gmra.mxu0 %v716
    %v895 = vpop.f32.mrf.mxu0
    %v896 = vadd.f32 %v686, %v895
    %v897 = vpop.f32.mrf.mxu0
    %898 = vmatprep.mubr.f32.mxu0 0.0
    %899 = vmatmul.mubr.f32.gmra.mxu0 %v719
    %v900 = vpop.f32.mrf.mxu0
    %v901 = vadd.f32 %v686, %v900
    %v902 = vpop.f32.mrf.mxu0
    %903 = vmatprep.mubr.f32.mxu0 0.0
    %904 = vmatmul.mubr.f32.gmra.mxu0 %v722
    %v905 = vpop.f32.mrf.mxu0
    %v906 = vadd.f32 %v686, %v905
    %v907 = vpop.f32.mrf.mxu0
    %908 = vmatprep.mubr.f32.mxu0 0.0
    %909 = vmatmul.mubr.f32.gmra.mxu0 %v725
    %v910 = vpop.f32.mrf.mxu0
    %v911 = vadd.f32 %v686, %v910
    %v912 = vpop.f32.mrf.mxu0
    %913 = vmatprep.mubr.f32.mxu0 0.0
    %914 = vmatmul.mubr.f32.gmra.mxu0 %v728
    %v915 = vpop.f32.mrf.mxu0
    %v916 = vadd.f32 %v686, %v915
    %v917 = vpop.f32.mrf.mxu0
    %918 = vmatprep.mubr.f32.mxu0 0.0
    %919 = vmatmul.mubr.f32.gmra.mxu0 %v731
    %v920 = vpop.f32.mrf.mxu0
    %v921 = vadd.f32 %v686, %v920
    %v922 = vpop.f32.mrf.mxu0
    %923 = vmatprep.mubr.f32.mxu0 0.0
    %924 = vmatmul.mubr.f32.gmra.mxu0 %v734
    %v925 = vpop.f32.mrf.mxu0
    %v926 = vadd.f32 %v686, %v925
    %v927 = vpop.f32.mrf.mxu0
    %928 = vmatprep.mubr.f32.mxu0 0.0
    %929 = vmatmul.mubr.f32.gmra.mxu0 %v737
    %v930 = vpop.f32.mrf.mxu0
    %v931 = vadd.f32 %v686, %v930
    %v932 = vpop.f32.mrf.mxu0
    %933 = vmatprep.mubr.f32.mxu0 0.0
    %934 = vmatmul.mubr.f32.gmra.mxu0 %v740
    %v935 = vpop.f32.mrf.mxu0
    %v936 = vadd.f32 %v686, %v935
    %v937 = vpop.f32.mrf.mxu0
    %938 = vmatprep.mubr.f32.mxu0 0.0
    %939 = vmatmul.mubr.f32.gmra.mxu0 %v743
    %v940 = vpop.f32.mrf.mxu0
    %v941 = vadd.f32 %v686, %v940
    %v942 = vpop.f32.mrf.mxu0
    %943 = vmatprep.mubr.f32.mxu0 0.0
    %944 = vmatmul.mubr.f32.gmra.mxu0 %v746
    %v945 = vpop.f32.mrf.mxu0
    %v946 = vadd.f32 %v686, %v945
    %v947 = vpop.f32.mrf.mxu0
    %948 = vmatprep.mubr.f32.mxu0 0.0
    %949 = vmatmul.mubr.f32.gmra.mxu0 %v749
    %v950 = vpop.f32.mrf.mxu0
    %v951 = vadd.f32 %v686, %v950
    %v952 = vpop.f32.mrf.mxu0
    %953 = vmatprep.mubr.f32.mxu0 0.0
    %954 = vmatmul.mubr.f32.gmra.mxu0 %v752
    %v955 = vpop.f32.mrf.mxu0
    %v956 = vadd.f32 %v686, %v955
    %v957 = vpop.f32.mrf.mxu0
    %958 = vmatprep.mubr.f32.mxu0 0.0
    %959 = vmatmul.mubr.f32.gmra.mxu0 %v755
    %v960 = vpop.f32.mrf.mxu0
    %v961 = vadd.f32 %v686, %v960
    %v962 = vpop.f32.mrf.mxu0
    %963 = vmatprep.mubr.f32.mxu0 0.0
    %964 = vmatmul.mubr.f32.gmra.mxu0 %v758
    %v965 = vpop.f32.mrf.mxu0
    %v966 = vadd.f32 %v686, %v965
    %v967 = vpop.f32.mrf.mxu0
    %968 = vmatprep.mubr.f32.mxu0 0.0
    %969 = vmatmul.mubr.f32.gmra.mxu0 %v761
    %v970 = vpop.f32.mrf.mxu0
    %v971 = vadd.f32 %v686, %v970
    %v972 = vpop.f32.mrf.mxu0
    %973 = vmatprep.mubr.f32.mxu0 0.0
    %974 = vmatmul.mubr.f32.gmra.mxu0 %v764
    %v975 = vpop.f32.mrf.mxu0
    %v976 = vadd.f32 %v686, %v975
    %v977 = vpop.f32.mrf.mxu0
    %978 = vmatprep.mubr.f32.mxu0 0.0
    %979 = vmatmul.mubr.f32.gmra.mxu0 %v767
    %v980 = vpop.f32.mrf.mxu0
    %v981 = vadd.f32 %v686, %v980
    %v982 = vpop.f32.mrf.mxu0
    %983 = vmatprep.mubr.f32.mxu0 0.0
    %984 = vmatmul.mubr.f32.gmra.mxu0 %v770
    %v985 = vpop.f32.mrf.mxu0
    %v986 = vadd.f32 %v686, %v985
    %v987 = vpop.f32.mrf.mxu0
    %988 = vmatprep.mubr.f32.mxu0 0.0
    %989 = vmatmul.mubr.f32.gmra.mxu0 %v773
    %v990 = vpop.f32.mrf.mxu0
    %v991 = vadd.f32 %v686, %v990
    %v992 = vpop.f32.mrf.mxu0
    %993 = vmatprep.mubr.f32.mxu0 0.0
    %994 = vmatmul.mubr.f32.gmra.mxu0 %v776
    %v995 = vpop.f32.mrf.mxu0
    %v996 = vadd.f32 %v686, %v995
    %v997 = vpop.f32.mrf.mxu0
    %998 = vmatprep.mubr.f32.mxu0 0.0
    %999 = vmatmul.mubr.f32.gmra.mxu0 %v779
    %v1000 = vpop.f32.mrf.mxu0
    %v1001 = vadd.f32 %v686, %v1000
    %v1002 = vpop.f32.mrf.mxu0
    %1003 = vmatprep.mubr.f32.mxu0 0.0
    %1004 = vmatmul.mubr.f32.gmra.mxu0 %v782
    %v1005 = vpop.f32.mrf.mxu0
    %v1006 = vadd.f32 %v686, %v1005
    %v1007 = vpop.f32.mrf.mxu0
    %1008 = vdwg.mxu0
    %v1009 = vmax.f32 %v851, 0.0
    %v1010 = vmax.f32 %v856, 0.0
    %v1011 = vmax.f32 %v861, 0.0
    %v1012 = vmax.f32 %v866, 0.0
    %v1013 = vmax.f32 %v871, 0.0
    %v1014 = vmax.f32 %v876, 0.0
    %v1015 = vmax.f32 %v881, 0.0
    %v1016 = vmax.f32 %v886, 0.0
    %v1017 = vmax.f32 %v891, 0.0
    %v1018 = vmax.f32 %v896, 0.0
    %v1019 = vmax.f32 %v901, 0.0
    %v1020 = vmax.f32 %v906, 0.0
    %v1021 = vmax.f32 %v911, 0.0
    %v1022 = vmax.f32 %v916, 0.0
    %v1023 = vmax.f32 %v921, 0.0
    %v1024 = vmax.f32 %v926, 0.0
    %v1025 = vmax.f32 %v931, 0.0
    %v1026 = vmax.f32 %v936, 0.0
    %v1027 = vmax.f32 %v941, 0.0
    %v1028 = vmax.f32 %v946, 0.0
    %v1029 = vmax.f32 %v951, 0.0
    %v1030 = vmax.f32 %v956, 0.0
    %v1031 = vmax.f32 %v961, 0.0
    %v1032 = vmax.f32 %v966, 0.0
    %v1033 = vmax.f32 %v971, 0.0
    %v1034 = vmax.f32 %v976, 0.0
    %v1035 = vmax.f32 %v981, 0.0
    %v1036 = vmax.f32 %v986, 0.0
    %v1037 = vmax.f32 %v991, 0.0
    %v1038 = vmax.f32 %v996, 0.0
    %v1039 = vmax.f32 %v1001, 0.0
    %v1040 = vmax.f32 %v1006, 0.0
    %v1041 = vpack.c.bf16 %v1010, %v1009
    %v1042 = vpack.c.bf16 %v1012, %v1011
    %v1043 = vpack.c.bf16 %v1014, %v1013
    %v1044 = vpack.c.bf16 %v1016, %v1015
    %v1045 = vpack.c.bf16 %v1018, %v1017
    %v1046 = vpack.c.bf16 %v1020, %v1019
    %v1047 = vpack.c.bf16 %v1022, %v1021
    %v1048 = vpack.c.bf16 %v1024, %v1023
    %v1049 = vpack.c.bf16 %v1026, %v1025
    %v1050 = vpack.c.bf16 %v1028, %v1027
    %v1051 = vpack.c.bf16 %v1030, %v1029
    %v1052 = vpack.c.bf16 %v1032, %v1031
    %v1053 = vpack.c.bf16 %v1034, %v1033
    %v1054 = vpack.c.bf16 %v1036, %v1035
    %v1055 = vpack.c.bf16 %v1038, %v1037
    %v1056 = vpack.c.bf16 %v1040, %v1039
    %v1073 = vunpack.c.l.b16 %v1041
    %v1074 = vunpack.c.h.b16 %v1041
    %v1075 = vunpack.c.l.b16 %v1042
    %v1076 = vunpack.c.h.b16 %v1042
    %v1077 = vunpack.c.l.b16 %v1043
    %v1078 = vunpack.c.h.b16 %v1043
    %v1079 = vunpack.c.l.b16 %v1044
    %v1080 = vunpack.c.h.b16 %v1044
    %v1081 = vunpack.c.l.b16 %v1045
    %v1082 = vunpack.c.h.b16 %v1045
    %v1083 = vunpack.c.l.b16 %v1046
    %v1084 = vunpack.c.h.b16 %v1046
    %v1085 = vunpack.c.l.b16 %v1047
    %v1086 = vunpack.c.h.b16 %v1047
    %v1087 = vunpack.c.l.b16 %v1048
    %v1088 = vunpack.c.h.b16 %v1048
    %v1089 = vunpack.c.l.b16 %v1049
    %v1090 = vunpack.c.h.b16 %v1049
    %v1091 = vunpack.c.l.b16 %v1050
    %v1092 = vunpack.c.h.b16 %v1050
    %v1093 = vunpack.c.l.b16 %v1051
    %v1094 = vunpack.c.h.b16 %v1051
    %v1095 = vunpack.c.l.b16 %v1052
    %v1096 = vunpack.c.h.b16 %v1052
    %v1097 = vunpack.c.l.b16 %v1053
    %v1098 = vunpack.c.h.b16 %v1053
    %v1099 = vunpack.c.l.b16 %v1054
    %v1100 = vunpack.c.h.b16 %v1054
    %v1101 = vunpack.c.l.b16 %v1055
    %v1102 = vunpack.c.h.b16 %v1055
    %v1103 = vunpack.c.l.b16 %v1056
    %v1104 = vunpack.c.h.b16 %v1056
    %v1105 = vpack.c.b16 %v1073, %v1073
    %v1106 = vpack.c.b16 %v1074, %v1074
    %v1107 = vpack.c.b16 %v1075, %v1075
    %v1108 = vpack.c.b16 %v1076, %v1076
    %v1109 = vpack.c.b16 %v1077, %v1077
    %v1110 = vpack.c.b16 %v1078, %v1078
    %v1111 = vpack.c.b16 %v1079, %v1079
    %v1112 = vpack.c.b16 %v1080, %v1080
    %v1113 = vpack.c.b16 %v1081, %v1081
    %v1114 = vpack.c.b16 %v1082, %v1082
    %v1115 = vpack.c.b16 %v1083, %v1083
    %v1116 = vpack.c.b16 %v1084, %v1084
    %v1117 = vpack.c.b16 %v1085, %v1085
    %v1118 = vpack.c.b16 %v1086, %v1086
    %v1119 = vpack.c.b16 %v1087, %v1087
    %v1120 = vpack.c.b16 %v1088, %v1088
    %v1121 = vpack.c.b16 %v1089, %v1089
    %v1122 = vpack.c.b16 %v1090, %v1090
    %v1123 = vpack.c.b16 %v1091, %v1091
    %v1124 = vpack.c.b16 %v1092, %v1092
    %v1125 = vpack.c.b16 %v1093, %v1093
    %v1126 = vpack.c.b16 %v1094, %v1094
    %v1127 = vpack.c.b16 %v1095, %v1095
    %v1128 = vpack.c.b16 %v1096, %v1096
    %v1129 = vpack.c.b16 %v1097, %v1097
    %v1130 = vpack.c.b16 %v1098, %v1098
    %v1131 = vpack.c.b16 %v1099, %v1099
    %v1132 = vpack.c.b16 %v1100, %v1100
    %v1133 = vpack.c.b16 %v1101, %v1101
    %v1134 = vpack.c.b16 %v1102, %v1102
    %v1135 = vpack.c.b16 %v1103, %v1103
    %v1136 = vpack.c.b16 %v1104, %v1104
    %1169 = vst [vmem:[%s4] sm:$0xf] %v1105
    %1170 = vst [vmem:[%s4 + $0x4] sm:$0xf] %v1106
    %1171 = vst [vmem:[%s4 + $0x8] sm:$0xf] %v1107
    %1172 = vst [vmem:[%s4 + $0xc] sm:$0xf] %v1108
    %1173 = vst [vmem:[%s4 + $0x10] sm:$0xf] %v1109
    %1174 = vst [vmem:[%s4 + $0x14] sm:$0xf] %v1110
    %1175 = vst [vmem:[%s4 + $0x18] sm:$0xf] %v1111
    %1176 = vst [vmem:[%s4 + $0x1c] sm:$0xf] %v1112
    %1177 = vst [vmem:[%s4 + $0x20] sm:$0xf] %v1113
    %1178 = vst [vmem:[%s4 + $0x24] sm:$0xf] %v1114
    %1179 = vst [vmem:[%s4 + $0x28] sm:$0xf] %v1115
    %1180 = vst [vmem:[%s4 + $0x2c] sm:$0xf] %v1116
    %1181 = vst [vmem:[%s4 + $0x30] sm:$0xf] %v1117
    %1182 = vst [vmem:[%s4 + $0x34] sm:$0xf] %v1118
    %1183 = vst [vmem:[%s4 + $0x38] sm:$0xf] %v1119
    %1184 = vst [vmem:[%s4 + $0x3c] sm:$0xf] %v1120
    %1185 = vst [vmem:[%s4 + $0x40] sm:$0xf] %v1121
    %1186 = vst [vmem:[%s4 + $0x44] sm:$0xf] %v1122
    %1187 = vst [vmem:[%s4 + $0x48] sm:$0xf] %v1123
    %1188 = vst [vmem:[%s4 + $0x4c] sm:$0xf] %v1124
    %1189 = vst [vmem:[%s4 + $0x50] sm:$0xf] %v1125
    %1190 = vst [vmem:[%s4 + $0x54] sm:$0xf] %v1126
    %1191 = vst [vmem:[%s4 + $0x58] sm:$0xf] %v1127
    %1192 = vst [vmem:[%s4 + $0x5c] sm:$0xf] %v1128
    %1193 = vst [vmem:[%s4 + $0x60] sm:$0xf] %v1129
    %1194 = vst [vmem:[%s4 + $0x64] sm:$0xf] %v1130
    %1195 = vst [vmem:[%s4 + $0x68] sm:$0xf] %v1131
    %1196 = vst [vmem:[%s4 + $0x6c] sm:$0xf] %v1132
    %1197 = vst [vmem:[%s4 + $0x70] sm:$0xf] %v1133
    %1198 = vst [vmem:[%s4 + $0x74] sm:$0xf] %v1134
    %1199 = vst [vmem:[%s4 + $0x78] sm:$0xf] %v1135
    %1200 = vst [vmem:[%s4 + $0x7c] sm:$0xf] %v1136
  $region25: #{gnn_forward.2} parent=0 // pred_fallthru
    _
  // Predicated region
  $region26: #{gnn_forward.2} parent=0 // pred_check
    _
  $region27: #{gnn_forward.2} parent=0 // pred_check_branch
    %1202 = sbr.rel (0) target = $region29
  $region28: #{gnn_forward.2} parent=0 // pred_region
    _
  $region29: #{gnn_forward.2} parent=0 // pred_fallthru
    _
  // Predicated region
  $region30: #{gnn_forward.2} parent=0 // pred_check
    _
  $region31: #{gnn_forward.2} parent=0 // pred_check_branch
    %1204 = sbr.rel (0) target = $region33
  $region32: #{gnn_forward.2} parent=0 // pred_region
    _
  $region33: #{gnn_forward.2} parent=0 // pred_fallthru
    _

</llo_original>
